<compile_context>
chip_gen: v5e
topology: v5e:2x2
jax: 0.10.0
libtpu: 0.0.40
codegen_flags: <defaults>
</compile_context>

<pallas_src>
import functools

import jax
import jax.numpy as jnp
import numpy as np
from jax.experimental import pallas as pl
from jax.experimental.pallas import tpu as pltpu


def _round_up(n, m):
    return ((n + m - 1) // m) * m


@functools.lru_cache(maxsize=None)
def _vmem_capacity_bytes():
    """Per-core VMEM capacity; falls back to the smallest (v7x, 64 MiB)."""
    try:
        return int(pltpu.get_tpu_info().vmem_capacity_bytes)
    except Exception:
        return 64 << 20


def _vmem_limit_bytes():
    return _vmem_capacity_bytes() * 3 // 4


# ---------------------------------------------------------------------------
# In-kernel helpers
# ---------------------------------------------------------------------------
def _col_to_row(col):
    """(n, 1) -> (1, n) sublane->lane relayout via iota/select/reduce.

    Avoids relying on Mosaic reshape/transpose support for this pattern; the
    (n, n) temporary is tiny (n = batch tile) and the reduce uses the XLU.
    """
    n = col.shape[0]
    r = jax.lax.broadcasted_iota(jnp.int32, (n, n), 0)
    c = jax.lax.broadcasted_iota(jnp.int32, (n, n), 1)
    return jnp.sum(jnp.where(r == c, col, 0.0), axis=0, keepdims=True)


# ---------------------------------------------------------------------------
# Pallas kernel builder
# ---------------------------------------------------------------------------
def _make_prodlda_kernel(*, compute_loss, loss_only, num_topic, p0_lanes):
    """Fused ProdLDA forward for one (tb, ...) batch tile.

    Weights arrive BN-folded and in bf16; matmuls accumulate in f32 on the
    MXU; all elementwise math is f32.
    """
    n_in = 15 if compute_loss else 12

    def kernel(*refs):
        (x_ref, eps_ref, w1_ref, b1_ref, w2_ref, b2_ref,
         wm_ref, bm_ref, wv_ref, bv_ref, wd_ref, bd_ref) = refs[:12]
        if compute_loss:
            pmean_ref, pvar_ref, plogvar_ref = refs[12:15]
        out_refs = list(refs[n_in:])
        recon_ref = None if loss_only else out_refs.pop(0)
        p0_ref = None if compute_loss else out_refs.pop(0)
        loss_ref = out_refs.pop(0) if compute_loss else None

        x = x_ref[...]          # (tb, Vp) bf16 — counts are exact in bf16
        eps = eps_ref[...]      # (tb, T)  f32
        mm = w1_ref.dtype       # matmul operand dtype (bf16)

        def softplus(h):
            # numerically-stable softplus = max(h, 0) + log1p(exp(-|h|))
            return jnp.maximum(h, 0.0) + jnp.log1p(jnp.exp(-jnp.abs(h)))

        # ---- encoder (bf16 operands, f32 MXU accumulation) -------------------
        en1 = softplus(
            jnp.dot(x, w1_ref[...], preferred_element_type=jnp.float32)
            + b1_ref[...])
        en2 = softplus(
            jnp.dot(en1.astype(mm), w2_ref[...],
                    preferred_element_type=jnp.float32) + b2_ref[...])
        # en2_drop: identity (eval mode)

        # ---- mean / logvar heads (BatchNorm folded, lane-0 aligned) ----------
        posterior_mean = jnp.dot(en2.astype(mm), wm_ref[...],
                                 preferred_element_type=jnp.float32) + bm_ref[...]
        posterior_logvar = jnp.dot(en2.astype(mm), wv_ref[...],
                                   preferred_element_type=jnp.float32) + bv_ref[...]

        # ---- reparameterization + topic proportions --------------------------
        # std = exp(0.5 * logvar): one EUP exp instead of exp + sqrt.
        posterior_std = jnp.exp(0.5 * posterior_logvar)
        z = posterior_mean + posterior_std * eps
        zm = jnp.max(z, axis=1, keepdims=True)
        ze = jnp.exp(z - zm)
        p0 = ze * pl.reciprocal(jnp.sum(ze, axis=1, keepdims=True), approx=False)
        # p_drop: identity (eval mode)

        # ---- decoder (BatchNorm folded) + softmax -----------------------------
        dec_logits = jnp.dot(p0.astype(mm), wd_ref[...],
                             preferred_element_type=jnp.float32) + bd_ref[...]
        dm = jnp.max(dec_logits, axis=1, keepdims=True)
        de = jnp.exp(dec_logits - dm)
        dsum = jnp.sum(de, axis=1, keepdims=True)

        if recon_ref is not None:
            recon = de * pl.reciprocal(dsum, approx=False)
            recon_ref[...] = recon.astype(recon_ref.dtype)

        if p0_ref is not None:
            pad = p0_lanes - num_topic
            if pad:
                p0_out = jnp.concatenate(
                    [p0, jnp.zeros((p0.shape[0], pad), p0.dtype)], axis=1)
            else:
                p0_out = p0
            p0_ref[...] = p0_out           # lane-dense, unmasked store

        if compute_loss:
            # Reconstruction NLL from the log-softmax: reuses dm/dsum, avoids a
            # full (tb, V) jnp.log and the +1e-10 fudge of the reference impl.
            log_recon = (dec_logits - dm) - jnp.log(dsum)
            nl = -jnp.sum(x.astype(jnp.float32) * log_recon,
                          axis=1, keepdims=True)                     # (tb, 1)
            posterior_var = posterior_std * posterior_std
            diff = posterior_mean - pmean_ref[...]
            inv_pvar = pl.reciprocal(pvar_ref[...], approx=False)
            kld = 0.5 * (jnp.sum((posterior_var + diff * diff) * inv_pvar
                                 + plogvar_ref[...] - posterior_logvar,
                                 axis=1, keepdims=True)
                         - float(num_topic))
            # One lane-dense (1, tb) row per grid step.
            loss_ref[...] = _col_to_row(nl + kld)[None]               # (1,1,tb)

    return kernel


# ---------------------------------------------------------------------------
# Host-side parameter preparation: fold eval-mode BatchNorm into the Linears,
# pad the vocab to a multiple of 128, cast matmul weights to bf16.
# ---------------------------------------------------------------------------
def _fold_bn_into_linear(w, b, gamma, beta, running_mean, running_var, eps=1e-5):
    scale = gamma / jnp.sqrt(running_var + eps)          # (F,)
    shift = beta - running_mean * scale                  # (F,)
    return w * scale[None, :], b * scale + shift


def _prepare_kernel_params(params, v_pad, matmul_dtype=jnp.bfloat16):
    f32 = jnp.float32
    wm, bm = _fold_bn_into_linear(params["mean_w"], params["mean_b"],
                                  *params["mean_bn"])
    wv, bv = _fold_bn_into_linear(params["logvar_w"], params["logvar_b"],
                                  *params["logvar_bn"])
    wd, bd = _fold_bn_into_linear(params["dec_w"], params["dec_b"],
                                  *params["decoder_bn"])
    w1, b1 = params["en1_w"], params["en1_b"]
    w2, b2 = params["en2_w"], params["en2_b"]
    V = w1.shape[0]
    if v_pad != V:
        # Zero rows of w1 ignore the padded x columns; a very negative decoder
        # bias drives the padded vocabulary columns to ~0 probability.
        w1 = jnp.pad(w1, ((0, v_pad - V), (0, 0)))
        wd = jnp.pad(wd, ((0, 0), (0, v_pad - V)))
        bd = jnp.pad(bd, (0, v_pad - V), constant_values=-1e9)
    return dict(
        w1=w1.astype(matmul_dtype), b1=b1[None, :].astype(f32),
        w2=w2.astype(matmul_dtype), b2=b2[None, :].astype(f32),
        wm=wm.astype(matmul_dtype), bm=bm[None, :].astype(f32),
        wv=wv.astype(matmul_dtype), bv=bv[None, :].astype(f32),
        wd=wd.astype(matmul_dtype), bd=bd[None, :].astype(f32),
    )


def _pick_batch_tile(B, v_pad, weight_bytes, block_b):
    """Batch tile from the per-chip VMEM budget; prefer a divisor of B."""
    cap = _vmem_capacity_bytes()
    if block_b is None:
        # Bytes per batch row that scale with tb: double-buffered bf16 x and
        # recon tiles plus ~5 live (tb, Vp) f32 intermediates in the body.
        per_row = 2 * v_pad * 2 + 2 * v_pad * 2 + 5 * v_pad * 4
        budget = max(int(cap * 0.5) - weight_bytes, 1 << 20)
        tb = 256 if cap >= (96 << 20) else 128
        while tb > 8 and tb * per_row > budget:
            tb //= 2
        # Keep >= 4 grid steps when the batch allows (pipeline overlap / cores).
        tb = min(tb, max(64, _round_up(-(-B // 4), 8)))
    else:
        tb = block_b
    tb = max(8, min(_round_up(tb, 8), _round_up(B, 8)))
    if B % tb:  # prefer a tile that divides B -> avoids the host-side jnp.pad
        for cand in range(tb, 7, -8):
            if B % cand == 0:
                tb = cand
                break
    return tb


# ---------------------------------------------------------------------------
# Wrapper
# ---------------------------------------------------------------------------
@functools.partial(
    jax.jit,
    static_argnames=("compute_loss", "avg_loss", "loss_only", "block_b",
                     "recon_dtype"))
def prodlda_forward(x, eps, params, compute_loss=False, avg_loss=True,
                    loss_only=False, block_b=None, recon_dtype=jnp.bfloat16):
    """ProdLDA forward.

    compute_loss=False          -> (recon, p0)
    compute_loss=True           -> (recon, loss)
    compute_loss=True, loss_only -> loss only (recon never written to HBM)
    recon_dtype: jnp.bfloat16 halves the largest HBM write; pass jnp.float32
    for exact dtype parity with the PyTorch module.
    """
    if loss_only and not compute_loss:
        raise ValueError("loss_only=True requires compute_loss=True")

    B, V = x.shape
    T = eps.shape[1]
    H1 = params["en1_w"].shape[1]
    H2 = params["en2_w"].shape[1]

    v_pad = _round_up(V, 128)
    p0_lanes = _round_up(T, 128)
    kp = _prepare_kernel_params(params, v_pad)
    weight_bytes = sum(int(np.prod(a.shape)) * a.dtype.itemsize
                       for a in kp.values())

    tb = _pick_batch_tile(B, v_pad, weight_bytes, block_b)
    b_pad = _round_up(B, tb)
    grid = (b_pad // tb,)

    # bf16 x halves the dominant HBM read (bag-of-words counts are exact).
    x_k = x.astype(jnp.bfloat16)
    eps_k = eps
    if b_pad != B or v_pad != V:
        x_k = jnp.pad(x_k, ((0, b_pad - B), (0, v_pad - V)))
    if b_pad != B:
        eps_k = jnp.pad(eps_k, ((0, b_pad - B), (0, 0)))

    def batch_spec(cols):
        return pl.BlockSpec((tb, cols), lambda i: (i, 0))

    # Whole-array, single-buffered VMEM residents (weights / biases / priors):
    # fetched once, no per-step DMA, no double-buffering.
    resident = pl.BlockSpec(memory_space=pltpu.MemorySpace.VMEM)

    kernel_inputs = [x_k, eps_k, kp["w1"], kp["b1"], kp["w2"], kp["b2"],
                     kp["wm"], kp["bm"], kp["wv"], kp["bv"], kp["wd"], kp["bd"]]
    in_specs = [batch_spec(v_pad), batch_spec(T)] + [resident] * 10

    if compute_loss:
        kernel_inputs += [params["prior_mean"], params["prior_var"],
                          params["prior_logvar"]]
        in_specs += [resident] * 3

    out_shape, out_specs = [], []
    if not loss_only:
        out_shape.append(jax.ShapeDtypeStruct((b_pad, v_pad), recon_dtype))
        out_specs.append(batch_spec(v_pad))
    if not compute_loss:
        out_shape.append(jax.ShapeDtypeStruct((b_pad, p0_lanes), jnp.float32))
        out_specs.append(batch_spec(p0_lanes))
    if compute_loss:
        out_shape.append(jax.ShapeDtypeStruct((grid[0], 1, tb), jnp.float32))
        out_specs.append(pl.BlockSpec((1, 1, tb), lambda i: (i, 0, 0)))

    # Advisory cost estimate so XLA can schedule around the call.
    flops = 2 * b_pad * (v_pad * H1 + H1 * H2 + 2 * H2 * T + T * v_pad)
    transcend = b_pad * (2 * (H1 + H2) + 2 * T + v_pad)
    out_bytes = sum(int(np.prod(s.shape)) * jnp.dtype(s.dtype).itemsize
                    for s in out_shape)
    in_bytes = x_k.size * 2 + eps_k.size * 4 + weight_bytes
    cost = pl.CostEstimate(flops=int(flops), transcendentals=int(transcend),
                           bytes_accessed=int(in_bytes + out_bytes))

    outputs = pl.pallas_call(
        _make_prodlda_kernel(compute_loss=compute_loss, loss_only=loss_only,
                             num_topic=T, p0_lanes=p0_lanes),
        grid=grid,
        out_shape=tuple(out_shape),
        in_specs=in_specs,
        out_specs=tuple(out_specs),
        compiler_params=pltpu.CompilerParams(
            dimension_semantics=("parallel",),
            vmem_limit_bytes=_vmem_limit_bytes(),
        ),
        cost_estimate=cost,
    )(*kernel_inputs)
    outputs = list(outputs)

    recon = None
    if not loss_only:
        recon = outputs.pop(0)
        if (b_pad, v_pad) != (B, V):
            recon = recon[:B, :V]
    if not compute_loss:
        p0 = outputs.pop(0)[:B, :T]
        return recon, p0

    loss = outputs.pop(0).reshape(b_pad)[:B]
    loss = jnp.mean(loss) if avg_loss else loss
    if loss_only:
        return loss
    return recon, loss


# ---------------------------------------------------------------------------
# Deterministic parameter init (mirrors nn.Linear defaults + decoder uniform init)
# ---------------------------------------------------------------------------
def init_params(key, num_input, en1_units, en2_units, num_topic, init_mult=1.0):
    ks = jax.random.split(key, 10)

    def linear(kw, kb, fan_in, fan_out):
        bound = 1.0 / np.sqrt(fan_in)
        w = jax.random.uniform(kw, (fan_in, fan_out), jnp.float32, -bound, bound)
        b = jax.random.uniform(kb, (fan_out,), jnp.float32, -bound, bound)
        return w, b

    en1_w, en1_b = linear(ks[0], ks[1], num_input, en1_units)
    en2_w, en2_b = linear(ks[2], ks[3], en1_units, en2_units)
    mean_w, mean_b = linear(ks[4], ks[5], en2_units, num_topic)
    logvar_w, logvar_b = linear(ks[6], ks[7], en2_units, num_topic)
    # decoder: weight ~ U(0, init_mult); bias keeps default Linear init.
    dec_w = jax.random.uniform(ks[8], (num_topic, num_input), jnp.float32,
                               0.0, init_mult)
    dec_b = jax.random.uniform(
        ks[9], (num_input,), jnp.float32,
        -1.0 / np.sqrt(num_topic), 1.0 / np.sqrt(num_topic),
    )

    def bn_params(f):
        return (jnp.ones((f,), jnp.float32), jnp.zeros((f,), jnp.float32),
                jnp.zeros((f,), jnp.float32), jnp.ones((f,), jnp.float32))

    # Laplace-approximation prior for Dirichlet(alpha=1)
    a = np.ones((1, num_topic), dtype=np.float32)
    prior_mean = (np.log(a).T - np.mean(np.log(a), 1)).T
    prior_var = ((1.0 / a * (1 - 2.0 / num_topic)).T
                 + 1.0 / (num_topic * num_topic) * np.sum(1.0 / a, 1)).T
    prior_logvar = np.log(prior_var)

    return dict(
        en1_w=en1_w, en1_b=en1_b,
        en2_w=en2_w, en2_b=en2_b,
        mean_w=mean_w, mean_b=mean_b,
        logvar_w=logvar_w, logvar_b=logvar_b,
        dec_w=dec_w, dec_b=dec_b,
        mean_bn=bn_params(num_topic),
        logvar_bn=bn_params(num_topic),
        decoder_bn=bn_params(num_input),
        prior_mean=jnp.asarray(prior_mean),
        prior_var=jnp.asarray(prior_var),
        prior_logvar=jnp.asarray(prior_logvar),
    )


# ---------------------------------------------------------------------------
# Plain-JAX reference mirroring the kernel's numerics (bf16 matmuls, folded BN,
# std = exp(0.5*logvar), log-softmax NLL) — used for the correctness assertion.
# ---------------------------------------------------------------------------
def prodlda_reference(x, eps, params, matmul_dtype=jnp.bfloat16):
    kp = _prepare_kernel_params(params, x.shape[1], matmul_dtype)
    T = eps.shape[1]

    def dot(a, w):
        return jnp.dot(a.astype(matmul_dtype), w,
                       preferred_element_type=jnp.float32)

    def sp(h):
        return jnp.logaddexp(h, 0.0)

    en1 = sp(dot(x, kp["w1"]) + kp["b1"])
    en2 = sp(dot(en1, kp["w2"]) + kp["b2"])
    pmean = dot(en2, kp["wm"]) + kp["bm"]
    plogvar = dot(en2, kp["wv"]) + kp["bv"]
    pstd = jnp.exp(0.5 * plogvar)
    z = pmean + pstd * eps
    p0 = jax.nn.softmax(z, axis=1)
    dec_logits = dot(p0, kp["wd"]) + kp["bd"]
    recon = jax.nn.softmax(dec_logits, axis=1)
    log_recon = jax.nn.log_softmax(dec_logits, axis=1)

    xq = x.astype(matmul_dtype).astype(jnp.float32)   # mirror the kernel's bf16 x
    nl = -jnp.sum(xq * log_recon, axis=1)
    pvar = pstd * pstd
    kld = 0.5 * (jnp.sum(pvar / params["prior_var"]
                         + (pmean - params["prior_mean"]) ** 2 / params["prior_var"]
                         + params["prior_logvar"] - plogvar, axis=1)
                 - float(T))
    return recon, p0, nl + kld


if __name__ == "__main__":
    # Small-but-MXU-friendly shapes: 256-row batch, 256-word vocab.
    B, V, H1, H2, T = 256, 256, 128, 64, 32

    key = jax.random.PRNGKey(0)
    k_params, k_x, k_eps = jax.random.split(key, 3)

    params = init_params(k_params, V, H1, H2, T, init_mult=1.0)
    # Bag-of-words-like non-negative counts.
    x = jnp.floor(jax.random.uniform(k_x, (B, V), jnp.float32, 0.0, 4.0))
    eps = jax.random.normal(k_eps, (B, T), jnp.float32)

    recon, p0 = prodlda_forward(x, eps, params, compute_loss=False)
    recon_l, loss_mean = prodlda_forward(x, eps, params, compute_loss=True,
                                         avg_loss=True)
    _, loss_vec = prodlda_forward(x, eps, params, compute_loss=True,
                                  avg_loss=False)
    loss_only_mean = prodlda_forward(x, eps, params, compute_loss=True,
                                     avg_loss=True, loss_only=True)
    jax.block_until_ready((recon, p0, recon_l, loss_mean, loss_vec,
                           loss_only_mean))

    # Sanity check against the plain-JAX reference.
    recon_ref, p0_ref, loss_ref = prodlda_reference(x, eps, params)
    np.testing.assert_allclose(np.asarray(p0), np.asarray(p0_ref),
                               atol=1e-6, rtol=1e-4)
    np.testing.assert_allclose(np.asarray(recon.astype(jnp.float32)),
                               np.asarray(recon_ref), atol=1e-4, rtol=1e-2)
    np.testing.assert_allclose(np.asarray(loss_vec), np.asarray(loss_ref),
                               rtol=1e-3, atol=1e-2)
    np.testing.assert_allclose(float(loss_mean), float(jnp.mean(loss_ref)),
                               rtol=1e-3)
    np.testing.assert_allclose(float(loss_only_mean), float(loss_mean),
                               rtol=1e-5, atol=1e-5)
    # Softmax outputs must be proper distributions (recon is bf16 -> loose atol).
    np.testing.assert_allclose(
        np.asarray(jnp.sum(recon.astype(jnp.float32), axis=1)), 1.0, atol=5e-3)
    np.testing.assert_allclose(np.asarray(jnp.sum(p0, axis=1)), 1.0, atol=1e-4)

    print("KERNEL_OK")
</pallas_src>

<mosaic_0001>
module attributes {stable_mosaic.version = 11 : i64} {
  func.func @kernel(%arg0: i32, %arg1: memref<64x256xbf16, #tpu.memory_space<vmem>>, %arg2: memref<64x32xf32, #tpu.memory_space<vmem>>, %arg3: memref<256x128xbf16, #tpu.memory_space<vmem>>, %arg4: memref<1x128xf32, #tpu.memory_space<vmem>>, %arg5: memref<128x64xbf16, #tpu.memory_space<vmem>>, %arg6: memref<1x64xf32, #tpu.memory_space<vmem>>, %arg7: memref<64x32xbf16, #tpu.memory_space<vmem>>, %arg8: memref<1x32xf32, #tpu.memory_space<vmem>>, %arg9: memref<64x32xbf16, #tpu.memory_space<vmem>>, %arg10: memref<1x32xf32, #tpu.memory_space<vmem>>, %arg11: memref<32x256xbf16, #tpu.memory_space<vmem>>, %arg12: memref<1x256xf32, #tpu.memory_space<vmem>>, %arg13: memref<64x256xbf16, #tpu.memory_space<vmem>>, %arg14: memref<64x128xf32, #tpu.memory_space<vmem>>) attributes {dimension_semantics = [#tpu.dimension_semantics<parallel>], iteration_bounds = array<i64: 4>, scalar_prefetch = 0 : i64, scratch_operands = 0 : i64, tpu.core_type = #tpu.core_type<tc>, window_params = [{transform_indices = @transform_0, window_bounds = array<i64: 64, 256>}, {transform_indices = @transform_1, window_bounds = array<i64: 64, 32>}, {pipeline_mode = #tpu.pipeline_mode<synchronous>, transform_indices = @transform_2, window_bounds = array<i64: 256, 128>}, {pipeline_mode = #tpu.pipeline_mode<synchronous>, transform_indices = @transform_3, window_bounds = array<i64: 1, 128>}, {pipeline_mode = #tpu.pipeline_mode<synchronous>, transform_indices = @transform_4, window_bounds = array<i64: 128, 64>}, {pipeline_mode = #tpu.pipeline_mode<synchronous>, transform_indices = @transform_5, window_bounds = array<i64: 1, 64>}, {pipeline_mode = #tpu.pipeline_mode<synchronous>, transform_indices = @transform_6, window_bounds = array<i64: 64, 32>}, {pipeline_mode = #tpu.pipeline_mode<synchronous>, transform_indices = @transform_7, window_bounds = array<i64: 1, 32>}, {pipeline_mode = #tpu.pipeline_mode<synchronous>, transform_indices = @transform_8, window_bounds = array<i64: 64, 32>}, {pipeline_mode = #tpu.pipeline_mode<synchronous>, transform_indices = @transform_9, window_bounds = array<i64: 1, 32>}, {pipeline_mode = #tpu.pipeline_mode<synchronous>, transform_indices = @transform_10, window_bounds = array<i64: 32, 256>}, {pipeline_mode = #tpu.pipeline_mode<synchronous>, transform_indices = @transform_11, window_bounds = array<i64: 1, 256>}, {transform_indices = @transform_12, window_bounds = array<i64: 64, 256>}, {transform_indices = @transform_13, window_bounds = array<i64: 64, 128>}]} {
    %c0 = arith.constant 0 : index
    %c0_0 = arith.constant 0 : index
    %0 = vector.load %arg1[%c0, %c0_0] : memref<64x256xbf16, #tpu.memory_space<vmem>>, vector<64x256xbf16>
    %c0_1 = arith.constant 0 : index
    %c0_2 = arith.constant 0 : index
    %1 = vector.load %arg2[%c0_1, %c0_2] : memref<64x32xf32, #tpu.memory_space<vmem>>, vector<64x32xf32>
    %c0_3 = arith.constant 0 : index
    %c0_4 = arith.constant 0 : index
    %2 = vector.load %arg3[%c0_3, %c0_4] : memref<256x128xbf16, #tpu.memory_space<vmem>>, vector<256x128xbf16>
    %cst = arith.constant dense<0.000000e+00> : vector<64x128xf32>
    %3 = tpu.matmul %0, %2, %cst {dimension_numbers = #tpu.dot_dimension_numbers<[1], [0], [0], [1], [0, 0, 1, 1], [], []>} : vector<64x256xbf16>, vector<256x128xbf16>, vector<64x128xf32> -> vector<64x128xf32>
    %c0_5 = arith.constant 0 : index
    %c0_6 = arith.constant 0 : index
    %4 = vector.load %arg4[%c0_5, %c0_6] : memref<1x128xf32, #tpu.memory_space<vmem>>, vector<1x128xf32>
    %5 = vector.broadcast %4 : vector<1x128xf32> to vector<64x128xf32>
    %6 = arith.addf %3, %5 : vector<64x128xf32>
    %cst_7 = arith.constant 0.000000e+00 : f32
    %7 = vector.broadcast %cst_7 : f32 to vector<64x128xf32>
    %8 = arith.maximumf %6, %7 : vector<64x128xf32>
    %9 = math.absf %6 : vector<64x128xf32>
    %cst_8 = arith.constant 0.000000e+00 : f32
    %10 = vector.broadcast %cst_8 : f32 to vector<64x128xf32>
    %11 = arith.subf %10, %9 : vector<64x128xf32>
    %12 = math.exp %11 : vector<64x128xf32>
    %13 = math.log1p %12 : vector<64x128xf32>
    %14 = arith.addf %8, %13 : vector<64x128xf32>
    %15 = arith.truncf %14 : vector<64x128xf32> to vector<64x128xbf16>
    %c0_9 = arith.constant 0 : index
    %c0_10 = arith.constant 0 : index
    %16 = vector.load %arg5[%c0_9, %c0_10] : memref<128x64xbf16, #tpu.memory_space<vmem>>, vector<128x64xbf16>
    %cst_11 = arith.constant dense<0.000000e+00> : vector<64x64xf32>
    %17 = tpu.matmul %15, %16, %cst_11 {dimension_numbers = #tpu.dot_dimension_numbers<[1], [0], [0], [1], [0, 0, 1, 1], [], []>} : vector<64x128xbf16>, vector<128x64xbf16>, vector<64x64xf32> -> vector<64x64xf32>
    %c0_12 = arith.constant 0 : index
    %c0_13 = arith.constant 0 : index
    %18 = vector.load %arg6[%c0_12, %c0_13] : memref<1x64xf32, #tpu.memory_space<vmem>>, vector<1x64xf32>
    %19 = vector.broadcast %18 : vector<1x64xf32> to vector<64x64xf32>
    %20 = arith.addf %17, %19 : vector<64x64xf32>
    %cst_14 = arith.constant 0.000000e+00 : f32
    %21 = vector.broadcast %cst_14 : f32 to vector<64x64xf32>
    %22 = arith.maximumf %20, %21 : vector<64x64xf32>
    %23 = math.absf %20 : vector<64x64xf32>
    %cst_15 = arith.constant 0.000000e+00 : f32
    %24 = vector.broadcast %cst_15 : f32 to vector<64x64xf32>
    %25 = arith.subf %24, %23 : vector<64x64xf32>
    %26 = math.exp %25 : vector<64x64xf32>
    %27 = math.log1p %26 : vector<64x64xf32>
    %28 = arith.addf %22, %27 : vector<64x64xf32>
    %29 = arith.truncf %28 : vector<64x64xf32> to vector<64x64xbf16>
    %c0_16 = arith.constant 0 : index
    %c0_17 = arith.constant 0 : index
    %30 = vector.load %arg7[%c0_16, %c0_17] : memref<64x32xbf16, #tpu.memory_space<vmem>>, vector<64x32xbf16>
    %cst_18 = arith.constant dense<0.000000e+00> : vector<64x32xf32>
    %31 = tpu.matmul %29, %30, %cst_18 {dimension_numbers = #tpu.dot_dimension_numbers<[1], [0], [0], [1], [0, 0, 1, 1], [], []>} : vector<64x64xbf16>, vector<64x32xbf16>, vector<64x32xf32> -> vector<64x32xf32>
    %c0_19 = arith.constant 0 : index
    %c0_20 = arith.constant 0 : index
    %32 = vector.load %arg8[%c0_19, %c0_20] : memref<1x32xf32, #tpu.memory_space<vmem>>, vector<1x32xf32>
    %33 = vector.broadcast %32 : vector<1x32xf32> to vector<64x32xf32>
    %34 = arith.addf %31, %33 : vector<64x32xf32>
    %35 = arith.truncf %28 : vector<64x64xf32> to vector<64x64xbf16>
    %c0_21 = arith.constant 0 : index
    %c0_22 = arith.constant 0 : index
    %36 = vector.load %arg9[%c0_21, %c0_22] : memref<64x32xbf16, #tpu.memory_space<vmem>>, vector<64x32xbf16>
    %cst_23 = arith.constant dense<0.000000e+00> : vector<64x32xf32>
    %37 = tpu.matmul %35, %36, %cst_23 {dimension_numbers = #tpu.dot_dimension_numbers<[1], [0], [0], [1], [0, 0, 1, 1], [], []>} : vector<64x64xbf16>, vector<64x32xbf16>, vector<64x32xf32> -> vector<64x32xf32>
    %c0_24 = arith.constant 0 : index
    %c0_25 = arith.constant 0 : index
    %38 = vector.load %arg10[%c0_24, %c0_25] : memref<1x32xf32, #tpu.memory_space<vmem>>, vector<1x32xf32>
    %39 = vector.broadcast %38 : vector<1x32xf32> to vector<64x32xf32>
    %40 = arith.addf %37, %39 : vector<64x32xf32>
    %cst_26 = arith.constant 5.000000e-01 : f32
    %41 = vector.broadcast %cst_26 : f32 to vector<64x32xf32>
    %42 = arith.mulf %41, %40 : vector<64x32xf32>
    %43 = math.exp %42 : vector<64x32xf32>
    %44 = arith.mulf %43, %1 : vector<64x32xf32>
    %45 = arith.addf %34, %44 : vector<64x32xf32>
    %cst_27 = arith.constant dense<0xFF800000> : vector<64xf32>
    %46 = vector.multi_reduction <maximumf>, %45, %cst_27 [1] : vector<64x32xf32> to vector<64xf32>
    %47 = vector.shape_cast %46 : vector<64xf32> to vector<64x1xf32>
    %48 = vector.broadcast %47 : vector<64x1xf32> to vector<64x32xf32>
    %49 = arith.subf %45, %48 : vector<64x32xf32>
    %50 = math.exp %49 : vector<64x32xf32>
    %cst_28 = arith.constant dense<0.000000e+00> : vector<64xf32>
    %51 = vector.multi_reduction <add>, %50, %cst_28 [1] : vector<64x32xf32> to vector<64xf32>
    %52 = vector.shape_cast %51 : vector<64xf32> to vector<64x1xf32>
    %53 = tpu.reciprocal %52 : vector<64x1xf32> -> vector<64x1xf32>
    %54 = vector.broadcast %53 : vector<64x1xf32> to vector<64x32xf32>
    %55 = arith.mulf %50, %54 : vector<64x32xf32>
    %56 = arith.truncf %55 : vector<64x32xf32> to vector<64x32xbf16>
    %c0_29 = arith.constant 0 : index
    %c0_30 = arith.constant 0 : index
    %57 = vector.load %arg11[%c0_29, %c0_30] : memref<32x256xbf16, #tpu.memory_space<vmem>>, vector<32x256xbf16>
    %cst_31 = arith.constant dense<0.000000e+00> : vector<64x256xf32>
    %58 = tpu.matmul %56, %57, %cst_31 {dimension_numbers = #tpu.dot_dimension_numbers<[1], [0], [0], [1], [0, 0, 1, 1], [], []>} : vector<64x32xbf16>, vector<32x256xbf16>, vector<64x256xf32> -> vector<64x256xf32>
    %c0_32 = arith.constant 0 : index
    %c0_33 = arith.constant 0 : index
    %59 = vector.load %arg12[%c0_32, %c0_33] : memref<1x256xf32, #tpu.memory_space<vmem>>, vector<1x256xf32>
    %60 = vector.broadcast %59 : vector<1x256xf32> to vector<64x256xf32>
    %61 = arith.addf %58, %60 : vector<64x256xf32>
    %cst_34 = arith.constant dense<0xFF800000> : vector<64xf32>
    %62 = vector.multi_reduction <maximumf>, %61, %cst_34 [1] : vector<64x256xf32> to vector<64xf32>
    %63 = vector.shape_cast %62 : vector<64xf32> to vector<64x1xf32>
    %64 = vector.broadcast %63 : vector<64x1xf32> to vector<64x256xf32>
    %65 = arith.subf %61, %64 : vector<64x256xf32>
    %66 = math.exp %65 : vector<64x256xf32>
    %cst_35 = arith.constant dense<0.000000e+00> : vector<64xf32>
    %67 = vector.multi_reduction <add>, %66, %cst_35 [1] : vector<64x256xf32> to vector<64xf32>
    %68 = vector.shape_cast %67 : vector<64xf32> to vector<64x1xf32>
    %69 = tpu.reciprocal %68 : vector<64x1xf32> -> vector<64x1xf32>
    %70 = vector.broadcast %69 : vector<64x1xf32> to vector<64x256xf32>
    %71 = arith.mulf %66, %70 : vector<64x256xf32>
    %72 = arith.truncf %71 : vector<64x256xf32> to vector<64x256xbf16>
    %c0_36 = arith.constant 0 : index
    %c0_37 = arith.constant 0 : index
    %73 = vector.load %arg13[%c0_36, %c0_37] : memref<64x256xbf16, #tpu.memory_space<vmem>>, vector<64x256xbf16>
    tpu.vector_store %arg13[%c0_36, %c0_37], %72 {strides = array<i32>} : memref<64x256xbf16, #tpu.memory_space<vmem>>, vector<64x256xbf16>,
    %cst_38 = arith.constant 0.000000e+00 : f32
    %74 = vector.broadcast %cst_38 : f32 to vector<64x96xf32>
    %75 = tpu.concatenate %55, %74 in 1 : vector<64x32xf32>, vector<64x96xf32> -> vector<64x128xf32>
    %c0_39 = arith.constant 0 : index
    %c0_40 = arith.constant 0 : index
    %76 = vector.load %arg14[%c0_39, %c0_40] : memref<64x128xf32, #tpu.memory_space<vmem>>, vector<64x128xf32>
    tpu.vector_store %arg14[%c0_39, %c0_40], %75 {strides = array<i32>} : memref<64x128xf32, #tpu.memory_space<vmem>>, vector<64x128xf32>,
    return
  }
  func.func @transform_0(%arg0: i32) -> (i32, i32) {
    %c0_i32 = arith.constant 0 : i32
    %c0_i32_0 = arith.constant 0 : i32
    return %arg0, %c0_i32 : i32, i32
  }
  func.func @transform_1(%arg0: i32) -> (i32, i32) {
    %c0_i32 = arith.constant 0 : i32
    %c0_i32_0 = arith.constant 0 : i32
    return %arg0, %c0_i32 : i32, i32
  }
  func.func @transform_2(%arg0: i32) -> (i32, i32) {
    %c0_i32 = arith.constant 0 : i32
    %c0_i32_0 = arith.constant 0 : i32
    %c0_i32_1 = arith.constant 0 : i32
    return %c0_i32, %c0_i32_0 : i32, i32
  }
  func.func @transform_3(%arg0: i32) -> (i32, i32) {
    %c0_i32 = arith.constant 0 : i32
    %c0_i32_0 = arith.constant 0 : i32
    %c0_i32_1 = arith.constant 0 : i32
    return %c0_i32, %c0_i32_0 : i32, i32
  }
  func.func @transform_4(%arg0: i32) -> (i32, i32) {
    %c0_i32 = arith.constant 0 : i32
    %c0_i32_0 = arith.constant 0 : i32
    %c0_i32_1 = arith.constant 0 : i32
    return %c0_i32, %c0_i32_0 : i32, i32
  }
  func.func @transform_5(%arg0: i32) -> (i32, i32) {
    %c0_i32 = arith.constant 0 : i32
    %c0_i32_0 = arith.constant 0 : i32
    %c0_i32_1 = arith.constant 0 : i32
    return %c0_i32, %c0_i32_0 : i32, i32
  }
  func.func @transform_6(%arg0: i32) -> (i32, i32) {
    %c0_i32 = arith.constant 0 : i32
    %c0_i32_0 = arith.constant 0 : i32
    %c0_i32_1 = arith.constant 0 : i32
    return %c0_i32, %c0_i32_0 : i32, i32
  }
  func.func @transform_7(%arg0: i32) -> (i32, i32) {
    %c0_i32 = arith.constant 0 : i32
    %c0_i32_0 = arith.constant 0 : i32
    %c0_i32_1 = arith.constant 0 : i32
    return %c0_i32, %c0_i32_0 : i32, i32
  }
  func.func @transform_8(%arg0: i32) -> (i32, i32) {
    %c0_i32 = arith.constant 0 : i32
    %c0_i32_0 = arith.constant 0 : i32
    %c0_i32_1 = arith.constant 0 : i32
    return %c0_i32, %c0_i32_0 : i32, i32
  }
  func.func @transform_9(%arg0: i32) -> (i32, i32) {
    %c0_i32 = arith.constant 0 : i32
    %c0_i32_0 = arith.constant 0 : i32
    %c0_i32_1 = arith.constant 0 : i32
    return %c0_i32, %c0_i32_0 : i32, i32
  }
  func.func @transform_10(%arg0: i32) -> (i32, i32) {
    %c0_i32 = arith.constant 0 : i32
    %c0_i32_0 = arith.constant 0 : i32
    %c0_i32_1 = arith.constant 0 : i32
    return %c0_i32, %c0_i32_0 : i32, i32
  }
  func.func @transform_11(%arg0: i32) -> (i32, i32) {
    %c0_i32 = arith.constant 0 : i32
    %c0_i32_0 = arith.constant 0 : i32
    %c0_i32_1 = arith.constant 0 : i32
    return %c0_i32, %c0_i32_0 : i32, i32
  }
  func.func @transform_12(%arg0: i32) -> (i32, i32) {
    %c0_i32 = arith.constant 0 : i32
    %c0_i32_0 = arith.constant 0 : i32
    return %arg0, %c0_i32 : i32, i32
  }
  func.func @transform_13(%arg0: i32) -> (i32, i32) {
    %c0_i32 = arith.constant 0 : i32
    %c0_i32_0 = arith.constant 0 : i32
    return %arg0, %c0_i32 : i32, i32
  }
}

</mosaic_0001>

<llo_original>
// kernel: prodlda_forward.1
$region0: #{prodlda_forward.1}
  #allocation0 [shape = 'u32[]', space=smem, size = 0x4, offset = 0x4, fixed_abs, tag = 'smem constant byte address 0x4 - core index']
  #allocation1 [shape = 'u32[72,128]{1,0:T(1,128)}', space=vmem, size = 0x9000, scoped, tag = 'internal scratch']
  %s0 = inlined_call_operand.vmem [shape: bf16[256,256], index: 0, kind: input, shape index: {}]
  %s1 = inlined_call_operand.vmem [shape: f32[256,32], index: 1, kind: input, shape index: {}]
  %s2 = inlined_call_operand.vmem [shape: bf16[256,128], index: 2, kind: input, shape index: {}]
  %s3 = inlined_call_operand.vmem [shape: f32[1,128], index: 3, kind: input, shape index: {}]
  %s4 = inlined_call_operand.vmem [shape: bf16[128,64], index: 4, kind: input, shape index: {}]
  %s5 = inlined_call_operand.vmem [shape: f32[1,64], index: 5, kind: input, shape index: {}]
  %s6 = inlined_call_operand.vmem [shape: bf16[64,32], index: 6, kind: input, shape index: {}]
  %s7 = inlined_call_operand.vmem [shape: f32[1,32], index: 7, kind: input, shape index: {}]
  %s8 = inlined_call_operand.vmem [shape: bf16[64,32], index: 8, kind: input, shape index: {}]
  %s9 = inlined_call_operand.vmem [shape: f32[1,32], index: 9, kind: input, shape index: {}]
  %s10 = inlined_call_operand.vmem [shape: bf16[32,256], index: 10, kind: input, shape index: {}]
  %s11 = inlined_call_operand.vmem [shape: f32[1,256], index: 11, kind: input, shape index: {}]
  %s12 = inlined_call_operand.hbm [shape: bf16[256,256], index: 12, kind: output, shape index: {0}]
  %s13 = inlined_call_operand.vmem [shape: f32[256,128], index: 13, kind: output, shape index: {1}]
  %14 = xla_tuple %s12, %s13
  %s15 = sld [smem:[#allocation0]]
  $region89: #{prodlda_forward.1} parent=0
    _
  %s17 = ssub.s32 1, %s15
  %s18 = scalar_select 0, %s17, %s15
  $region1: #{prodlda_forward.1} parent=0
    #allocation2 [shape = 'u8[65536]{0}', space=vmem, size = 0x10000, scoped, tag = 'output window, operand 0']
    #allocation3 [shape = 's32[2]{0}', space=sflag, size = 0x8, scoped, tag = 'scoped memory for prodlda_forward.1']
    %19 = vsyncpa [#allocation3], 0
    %s20 = scalar_lea.sflag [#allocation3], 1
    %21 = vsyncpa %s20, 0
    loop: start=0, step=1, limit=6
    $region2: #{prodlda_forward.1} parent=1 // loop_pre_header
      _
    $region3: #{prodlda_forward.1} parent=1 // loop_header
      %s23 = sphi 0, %s27
      %p24 = scmp.ge.s32.totalorder %s23, 6
      %s33 = sphi 0, %s35
      %s36 = sphi 0, %s33
      %s37 = sphi 0, %s36
      %s53 = sphi 0, %s37
      %s59 = sphi 0, %s61
      %s62 = sphi 0, %s59
      %s63 = sphi 0, %s62
      %s79 = sphi 0, %s63
      %s83 = sphi 0, %s83
      %s85 = sphi 0, %s83
      %s86 = sphi 0, %s85
      %s100 = sphi 0, %s86
      %s104 = sphi 0, %s104
      %s106 = sphi 0, %s104
      %s107 = sphi 0, %s106
      %s121 = sphi 0, %s107
      %s125 = sphi 0, %s125
      %s127 = sphi 0, %s125
      %s128 = sphi 0, %s127
      %s142 = sphi 0, %s128
      %s146 = sphi 0, %s146
      %s148 = sphi 0, %s146
      %s149 = sphi 0, %s148
      %s163 = sphi 0, %s149
      %s167 = sphi 0, %s167
      %s169 = sphi 0, %s167
      %s170 = sphi 0, %s169
      %s184 = sphi 0, %s170
      %s188 = sphi 0, %s188
      %s190 = sphi 0, %s188
      %s191 = sphi 0, %s190
      %s205 = sphi 0, %s191
      %s209 = sphi 0, %s209
      %s211 = sphi 0, %s209
      %s212 = sphi 0, %s211
      %s226 = sphi 0, %s212
      %s230 = sphi 0, %s230
      %s232 = sphi 0, %s230
      %s233 = sphi 0, %s232
      %s247 = sphi 0, %s233
      %s251 = sphi 0, %s251
      %s253 = sphi 0, %s251
      %s254 = sphi 0, %s253
      %s268 = sphi 0, %s254
      %s272 = sphi 0, %s272
      %s274 = sphi 0, %s272
      %s275 = sphi 0, %s274
      %s289 = sphi 0, %s275
      %s295 = sphi 0, %s297
      %s298 = sphi 0, %s295
      %s299 = sphi 0, %s298
      %s315 = sphi 0, %s299
      %s321 = sphi 0, %s323
      %s324 = sphi 0, %s321
      %s325 = sphi 0, %s324
      %s341 = sphi 0, %s325
    $region4: #{prodlda_forward.1} parent=1 // loop_header_branch
      %26 = sbr.rel (%p24) target = $region8
    $region5: #{prodlda_forward.1} parent=1 // loop_body
      %s28 = ssub.s32 %s23, 1
      %s29 = ssub.s32 %s23, 2
      %s30 = sadd.s32 %s23, 1
      %s31 = ssub.s32 %s23, %s30
      %p32 = scmp.eq.s32.totalorder %s31, 0
      %s34 = sadd.s32 %s33, 1
      %s35 = scalar_select %p32, %s33, %s34
      %p38 = pneg %p32
      %p39 = scmp.eq.s32.totalorder %s23, 3
      %p40 = por %p38, %p39
      %p41 = scmp.ne.s32.totalorder %s33, %s36
      %p42 = scmp.eq.s32.totalorder %s23, 0
      %p43 = por %p41, %p42
      %p44 = scmp.ne.s32.totalorder %s33, %s36
      %p45 = scmp.eq.s32.totalorder %s28, 3
      %p46 = por %p44, %p45
      %p47 = scmp.ne.s32.totalorder %s36, %s37
      %p48 = scmp.eq.s32.totalorder %s28, 0
      %p49 = por %p47, %p48
      %p50 = scmp.ne.s32.totalorder %s36, %s37
      %p51 = scmp.eq.s32.totalorder %s29, 3
      %p52 = por %p50, %p51
      %p54 = scmp.ne.s32.totalorder %s37, %s53
      %p55 = scmp.eq.s32.totalorder %s29, 0
      %p56 = por %p54, %p55
      %s57 = ssub.s32 %s23, %s30
      %p58 = scmp.eq.s32.totalorder %s57, 0
      %s60 = sadd.s32 %s59, 1
      %s61 = scalar_select %p58, %s59, %s60
      %p64 = pneg %p58
      %p65 = scmp.eq.s32.totalorder %s23, 3
      %p66 = por %p64, %p65
      %p67 = scmp.ne.s32.totalorder %s59, %s62
      %p68 = scmp.eq.s32.totalorder %s23, 0
      %p69 = por %p67, %p68
      %p70 = scmp.ne.s32.totalorder %s59, %s62
      %p71 = scmp.eq.s32.totalorder %s28, 3
      %p72 = por %p70, %p71
      %p73 = scmp.ne.s32.totalorder %s62, %s63
      %p74 = scmp.eq.s32.totalorder %s28, 0
      %p75 = por %p73, %p74
      %p76 = scmp.ne.s32.totalorder %s62, %s63
      %p77 = scmp.eq.s32.totalorder %s29, 3
      %p78 = por %p76, %p77
      %p80 = scmp.ne.s32.totalorder %s63, %s79
      %p81 = scmp.eq.s32.totalorder %s29, 0
      %p82 = por %p80, %p81
      %s84 = sadd.s32 %s83, 1
      %p87 = scmp.eq.s32.totalorder %s23, 3
      %p88 = scmp.ne.s32.totalorder %s83, %s85
      %p89 = scmp.eq.s32.totalorder %s23, 0
      %p90 = por %p88, %p89
      %p91 = scmp.ne.s32.totalorder %s83, %s85
      %p92 = scmp.eq.s32.totalorder %s28, 3
      %p93 = por %p91, %p92
      %p94 = scmp.ne.s32.totalorder %s85, %s86
      %p95 = scmp.eq.s32.totalorder %s28, 0
      %p96 = por %p94, %p95
      %p97 = scmp.ne.s32.totalorder %s85, %s86
      %p98 = scmp.eq.s32.totalorder %s29, 3
      %p99 = por %p97, %p98
      %p101 = scmp.ne.s32.totalorder %s86, %s100
      %p102 = scmp.eq.s32.totalorder %s29, 0
      %p103 = por %p101, %p102
      %s105 = sadd.s32 %s104, 1
      %p108 = scmp.eq.s32.totalorder %s23, 3
      %p109 = scmp.ne.s32.totalorder %s104, %s106
      %p110 = scmp.eq.s32.totalorder %s23, 0
      %p111 = por %p109, %p110
      %p112 = scmp.ne.s32.totalorder %s104, %s106
      %p113 = scmp.eq.s32.totalorder %s28, 3
      %p114 = por %p112, %p113
      %p115 = scmp.ne.s32.totalorder %s106, %s107
      %p116 = scmp.eq.s32.totalorder %s28, 0
      %p117 = por %p115, %p116
      %p118 = scmp.ne.s32.totalorder %s106, %s107
      %p119 = scmp.eq.s32.totalorder %s29, 3
      %p120 = por %p118, %p119
      %p122 = scmp.ne.s32.totalorder %s107, %s121
      %p123 = scmp.eq.s32.totalorder %s29, 0
      %p124 = por %p122, %p123
      %s126 = sadd.s32 %s125, 1
      %p129 = scmp.eq.s32.totalorder %s23, 3
      %p130 = scmp.ne.s32.totalorder %s125, %s127
      %p131 = scmp.eq.s32.totalorder %s23, 0
      %p132 = por %p130, %p131
      %p133 = scmp.ne.s32.totalorder %s125, %s127
      %p134 = scmp.eq.s32.totalorder %s28, 3
      %p135 = por %p133, %p134
      %p136 = scmp.ne.s32.totalorder %s127, %s128
      %p137 = scmp.eq.s32.totalorder %s28, 0
      %p138 = por %p136, %p137
      %p139 = scmp.ne.s32.totalorder %s127, %s128
      %p140 = scmp.eq.s32.totalorder %s29, 3
      %p141 = por %p139, %p140
      %p143 = scmp.ne.s32.totalorder %s128, %s142
      %p144 = scmp.eq.s32.totalorder %s29, 0
      %p145 = por %p143, %p144
      %s147 = sadd.s32 %s146, 1
      %p150 = scmp.eq.s32.totalorder %s23, 3
      %p151 = scmp.ne.s32.totalorder %s146, %s148
      %p152 = scmp.eq.s32.totalorder %s23, 0
      %p153 = por %p151, %p152
      %p154 = scmp.ne.s32.totalorder %s146, %s148
      %p155 = scmp.eq.s32.totalorder %s28, 3
      %p156 = por %p154, %p155
      %p157 = scmp.ne.s32.totalorder %s148, %s149
      %p158 = scmp.eq.s32.totalorder %s28, 0
      %p159 = por %p157, %p158
      %p160 = scmp.ne.s32.totalorder %s148, %s149
      %p161 = scmp.eq.s32.totalorder %s29, 3
      %p162 = por %p160, %p161
      %p164 = scmp.ne.s32.totalorder %s149, %s163
      %p165 = scmp.eq.s32.totalorder %s29, 0
      %p166 = por %p164, %p165
      %s168 = sadd.s32 %s167, 1
      %p171 = scmp.eq.s32.totalorder %s23, 3
      %p172 = scmp.ne.s32.totalorder %s167, %s169
      %p173 = scmp.eq.s32.totalorder %s23, 0
      %p174 = por %p172, %p173
      %p175 = scmp.ne.s32.totalorder %s167, %s169
      %p176 = scmp.eq.s32.totalorder %s28, 3
      %p177 = por %p175, %p176
      %p178 = scmp.ne.s32.totalorder %s169, %s170
      %p179 = scmp.eq.s32.totalorder %s28, 0
      %p180 = por %p178, %p179
      %p181 = scmp.ne.s32.totalorder %s169, %s170
      %p182 = scmp.eq.s32.totalorder %s29, 3
      %p183 = por %p181, %p182
      %p185 = scmp.ne.s32.totalorder %s170, %s184
      %p186 = scmp.eq.s32.totalorder %s29, 0
      %p187 = por %p185, %p186
      %s189 = sadd.s32 %s188, 1
      %p192 = scmp.eq.s32.totalorder %s23, 3
      %p193 = scmp.ne.s32.totalorder %s188, %s190
      %p194 = scmp.eq.s32.totalorder %s23, 0
      %p195 = por %p193, %p194
      %p196 = scmp.ne.s32.totalorder %s188, %s190
      %p197 = scmp.eq.s32.totalorder %s28, 3
      %p198 = por %p196, %p197
      %p199 = scmp.ne.s32.totalorder %s190, %s191
      %p200 = scmp.eq.s32.totalorder %s28, 0
      %p201 = por %p199, %p200
      %p202 = scmp.ne.s32.totalorder %s190, %s191
      %p203 = scmp.eq.s32.totalorder %s29, 3
      %p204 = por %p202, %p203
      %p206 = scmp.ne.s32.totalorder %s191, %s205
      %p207 = scmp.eq.s32.totalorder %s29, 0
      %p208 = por %p206, %p207
      %s210 = sadd.s32 %s209, 1
      %p213 = scmp.eq.s32.totalorder %s23, 3
      %p214 = scmp.ne.s32.totalorder %s209, %s211
      %p215 = scmp.eq.s32.totalorder %s23, 0
      %p216 = por %p214, %p215
      %p217 = scmp.ne.s32.totalorder %s209, %s211
      %p218 = scmp.eq.s32.totalorder %s28, 3
      %p219 = por %p217, %p218
      %p220 = scmp.ne.s32.totalorder %s211, %s212
      %p221 = scmp.eq.s32.totalorder %s28, 0
      %p222 = por %p220, %p221
      %p223 = scmp.ne.s32.totalorder %s211, %s212
      %p224 = scmp.eq.s32.totalorder %s29, 3
      %p225 = por %p223, %p224
      %p227 = scmp.ne.s32.totalorder %s212, %s226
      %p228 = scmp.eq.s32.totalorder %s29, 0
      %p229 = por %p227, %p228
      %s231 = sadd.s32 %s230, 1
      %p234 = scmp.eq.s32.totalorder %s23, 3
      %p235 = scmp.ne.s32.totalorder %s230, %s232
      %p236 = scmp.eq.s32.totalorder %s23, 0
      %p237 = por %p235, %p236
      %p238 = scmp.ne.s32.totalorder %s230, %s232
      %p239 = scmp.eq.s32.totalorder %s28, 3
      %p240 = por %p238, %p239
      %p241 = scmp.ne.s32.totalorder %s232, %s233
      %p242 = scmp.eq.s32.totalorder %s28, 0
      %p243 = por %p241, %p242
      %p244 = scmp.ne.s32.totalorder %s232, %s233
      %p245 = scmp.eq.s32.totalorder %s29, 3
      %p246 = por %p244, %p245
      %p248 = scmp.ne.s32.totalorder %s233, %s247
      %p249 = scmp.eq.s32.totalorder %s29, 0
      %p250 = por %p248, %p249
      %s252 = sadd.s32 %s251, 1
      %p255 = scmp.eq.s32.totalorder %s23, 3
      %p256 = scmp.ne.s32.totalorder %s251, %s253
      %p257 = scmp.eq.s32.totalorder %s23, 0
      %p258 = por %p256, %p257
      %p259 = scmp.ne.s32.totalorder %s251, %s253
      %p260 = scmp.eq.s32.totalorder %s28, 3
      %p261 = por %p259, %p260
      %p262 = scmp.ne.s32.totalorder %s253, %s254
      %p263 = scmp.eq.s32.totalorder %s28, 0
      %p264 = por %p262, %p263
      %p265 = scmp.ne.s32.totalorder %s253, %s254
      %p266 = scmp.eq.s32.totalorder %s29, 3
      %p267 = por %p265, %p266
      %p269 = scmp.ne.s32.totalorder %s254, %s268
      %p270 = scmp.eq.s32.totalorder %s29, 0
      %p271 = por %p269, %p270
      %s273 = sadd.s32 %s272, 1
      %p276 = scmp.eq.s32.totalorder %s23, 3
      %p277 = scmp.ne.s32.totalorder %s272, %s274
      %p278 = scmp.eq.s32.totalorder %s23, 0
      %p279 = por %p277, %p278
      %p280 = scmp.ne.s32.totalorder %s272, %s274
      %p281 = scmp.eq.s32.totalorder %s28, 3
      %p282 = por %p280, %p281
      %p283 = scmp.ne.s32.totalorder %s274, %s275
      %p284 = scmp.eq.s32.totalorder %s28, 0
      %p285 = por %p283, %p284
      %p286 = scmp.ne.s32.totalorder %s274, %s275
      %p287 = scmp.eq.s32.totalorder %s29, 3
      %p288 = por %p286, %p287
      %p290 = scmp.ne.s32.totalorder %s275, %s289
      %p291 = scmp.eq.s32.totalorder %s29, 0
      %p292 = por %p290, %p291
      %s293 = ssub.s32 %s23, %s30
      %p294 = scmp.eq.s32.totalorder %s293, 0
      %s296 = sadd.s32 %s295, 1
      %s297 = scalar_select %p294, %s295, %s296
      %p300 = pneg %p294
      %p301 = scmp.eq.s32.totalorder %s23, 3
      %p302 = por %p300, %p301
      %p303 = scmp.ne.s32.totalorder %s295, %s298
      %p304 = scmp.eq.s32.totalorder %s23, 0
      %p305 = por %p303, %p304
      %p306 = scmp.ne.s32.totalorder %s295, %s298
      %p307 = scmp.eq.s32.totalorder %s28, 3
      %p308 = por %p306, %p307
      %p309 = scmp.ne.s32.totalorder %s298, %s299
      %p310 = scmp.eq.s32.totalorder %s28, 0
      %p311 = por %p309, %p310
      %p312 = scmp.ne.s32.totalorder %s298, %s299
      %p313 = scmp.eq.s32.totalorder %s29, 3
      %p314 = por %p312, %p313
      %p316 = scmp.ne.s32.totalorder %s299, %s315
      %p317 = scmp.eq.s32.totalorder %s29, 0
      %p318 = por %p316, %p317
      %s319 = ssub.s32 %s23, %s30
      %p320 = scmp.eq.s32.totalorder %s319, 0
      %s322 = sadd.s32 %s321, 1
      %s323 = scalar_select %p320, %s321, %s322
      %p326 = pneg %p320
      %p327 = scmp.eq.s32.totalorder %s23, 3
      %p328 = por %p326, %p327
      %p329 = scmp.ne.s32.totalorder %s321, %s324
      %p330 = scmp.eq.s32.totalorder %s23, 0
      %p331 = por %p329, %p330
      %p332 = scmp.ne.s32.totalorder %s321, %s324
      %p333 = scmp.eq.s32.totalorder %s28, 3
      %p334 = por %p332, %p333
      %p335 = scmp.ne.s32.totalorder %s324, %s325
      %p336 = scmp.eq.s32.totalorder %s28, 0
      %p337 = por %p335, %p336
      %p338 = scmp.ne.s32.totalorder %s324, %s325
      %p339 = scmp.eq.s32.totalorder %s29, 3
      %p340 = por %p338, %p339
      %p342 = scmp.ne.s32.totalorder %s325, %s341
      %p343 = scmp.eq.s32.totalorder %s29, 0
      %p344 = por %p342, %p343
      %p345 = scmp.le.s32.totalorder 1, %s23
      %p346 = scmp.lt.s32.totalorder %s23, 5
      %p347 = pnand %p345, %p346
      %p348 = pneg %p347
      // Predicated region
      $region9: #{prodlda_forward.1} parent=5 // pred_check
        _
      $region10: #{prodlda_forward.1} parent=5 // pred_check_branch
        %350 = sbr.rel (%p347) target = $region12
      $region11: #{prodlda_forward.1} parent=5 // pred_region
        %s351 = ssub.s32 %s23, 1
        // Predicated region
        $region13: #{prodlda_forward.1} parent=11 // pred_check
          %p352 = pneg %p96
        $region14: #{prodlda_forward.1} parent=11 // pred_check_branch
          %354 = sbr.rel (%p352) target = $region16
        $region15: #{prodlda_forward.1} parent=11 // pred_region
          _
        $region16: #{prodlda_forward.1} parent=11 // pred_fallthru
          _
        // Predicated region
        $region17: #{prodlda_forward.1} parent=11 // pred_check
          %p355 = pneg %p117
        $region18: #{prodlda_forward.1} parent=11 // pred_check_branch
          %357 = sbr.rel (%p355) target = $region20
        $region19: #{prodlda_forward.1} parent=11 // pred_region
          _
        $region20: #{prodlda_forward.1} parent=11 // pred_fallthru
          _
        // Predicated region
        $region21: #{prodlda_forward.1} parent=11 // pred_check
          %p358 = pneg %p138
        $region22: #{prodlda_forward.1} parent=11 // pred_check_branch
          %360 = sbr.rel (%p358) target = $region24
        $region23: #{prodlda_forward.1} parent=11 // pred_region
          _
        $region24: #{prodlda_forward.1} parent=11 // pred_fallthru
          _
        // Predicated region
        $region25: #{prodlda_forward.1} parent=11 // pred_check
          %p361 = pneg %p159
        $region26: #{prodlda_forward.1} parent=11 // pred_check_branch
          %363 = sbr.rel (%p361) target = $region28
        $region27: #{prodlda_forward.1} parent=11 // pred_region
          _
        $region28: #{prodlda_forward.1} parent=11 // pred_fallthru
          _
        // Predicated region
        $region29: #{prodlda_forward.1} parent=11 // pred_check
          %p364 = pneg %p180
        $region30: #{prodlda_forward.1} parent=11 // pred_check_branch
          %366 = sbr.rel (%p364) target = $region32
        $region31: #{prodlda_forward.1} parent=11 // pred_region
          _
        $region32: #{prodlda_forward.1} parent=11 // pred_fallthru
          _
        // Predicated region
        $region33: #{prodlda_forward.1} parent=11 // pred_check
          %p367 = pneg %p201
        $region34: #{prodlda_forward.1} parent=11 // pred_check_branch
          %369 = sbr.rel (%p367) target = $region36
        $region35: #{prodlda_forward.1} parent=11 // pred_region
          _
        $region36: #{prodlda_forward.1} parent=11 // pred_fallthru
          _
        // Predicated region
        $region37: #{prodlda_forward.1} parent=11 // pred_check
          %p370 = pneg %p222
        $region38: #{prodlda_forward.1} parent=11 // pred_check_branch
          %372 = sbr.rel (%p370) target = $region40
        $region39: #{prodlda_forward.1} parent=11 // pred_region
          _
        $region40: #{prodlda_forward.1} parent=11 // pred_fallthru
          _
        // Predicated region
        $region41: #{prodlda_forward.1} parent=11 // pred_check
          %p373 = pneg %p243
        $region42: #{prodlda_forward.1} parent=11 // pred_check_branch
          %375 = sbr.rel (%p373) target = $region44
        $region43: #{prodlda_forward.1} parent=11 // pred_region
          _
        $region44: #{prodlda_forward.1} parent=11 // pred_fallthru
          _
        // Predicated region
        $region45: #{prodlda_forward.1} parent=11 // pred_check
          %p376 = pneg %p264
        $region46: #{prodlda_forward.1} parent=11 // pred_check_branch
          %378 = sbr.rel (%p376) target = $region48
        $region47: #{prodlda_forward.1} parent=11 // pred_region
          _
        $region48: #{prodlda_forward.1} parent=11 // pred_fallthru
          _
        // Predicated region
        $region49: #{prodlda_forward.1} parent=11 // pred_check
          %p379 = pneg %p285
        $region50: #{prodlda_forward.1} parent=11 // pred_check_branch
          %381 = sbr.rel (%p379) target = $region52
        $region51: #{prodlda_forward.1} parent=11 // pred_region
          _
        $region52: #{prodlda_forward.1} parent=11 // pred_fallthru
          _
      $region12: #{prodlda_forward.1} parent=5 // pred_fallthru
        _
      %p382 = scmp.lt.s32.totalorder %s23, 4
      // Predicated region
      $region53: #{prodlda_forward.1} parent=5 // pred_check
        %p383 = pneg %p382
      $region54: #{prodlda_forward.1} parent=5 // pred_check_branch
        %385 = sbr.rel (%p383) target = $region56
      $region55: #{prodlda_forward.1} parent=5 // pred_region
        // Predicated region
        $region57: #{prodlda_forward.1} parent=55 // pred_check
          %p386 = pneg %p43
        $region58: #{prodlda_forward.1} parent=55 // pred_check_branch
          %388 = sbr.rel (%p386) target = $region60
        $region59: #{prodlda_forward.1} parent=55 // pred_region
          %s389 = smul.u32 8, %s23
          %p390 = scmp.lt.s32.totalorder %s389, 31
          %s391 = scalar_select %p390, %s389, 31
          %s392 = smul.addr %s391, 2
          %s393 = smul.addr %s392, 4
          %s394 = scalar_lea.vmem %s0, %s393
          %s395 = smul.u32 8, %s23
        $region60: #{prodlda_forward.1} parent=55 // pred_fallthru
          _
        // Predicated region
        $region61: #{prodlda_forward.1} parent=55 // pred_check
          %p396 = pneg %p69
        $region62: #{prodlda_forward.1} parent=55 // pred_check_branch
          %398 = sbr.rel (%p396) target = $region64
        $region63: #{prodlda_forward.1} parent=55 // pred_region
          %s399 = smul.u32 8, %s23
          %p400 = scmp.lt.s32.totalorder %s399, 31
          %s401 = scalar_select %p400, %s399, 31
          %s402 = smul.addr %s401, 8
          %s403 = scalar_lea.vmem %s1, %s402
          %s404 = smul.u32 8, %s23
        $region64: #{prodlda_forward.1} parent=55 // pred_fallthru
          _
      $region56: #{prodlda_forward.1} parent=5 // pred_fallthru
        _
      %p405 = scmp.le.s32.totalorder 1, %s23
      %p406 = scmp.lt.s32.totalorder %s23, 5
      %p407 = pnand %p405, %p406
      %p408 = pneg %p407
      // Predicated region
      $region65: #{prodlda_forward.1} parent=5 // pred_check
        _
      $region66: #{prodlda_forward.1} parent=5 // pred_check_branch
        %410 = sbr.rel (%p407) target = $region68
      $region67: #{prodlda_forward.1} parent=5 // pred_region
        %s411 = ssub.s32 %s23, 1
        %s412 = smul.u32 8, %s28
        %p413 = scmp.lt.s32.totalorder %s412, 31
        %s414 = scalar_select %p413, %s412, 31
        %s415 = smul.addr %s414, 2
        %s416 = smul.addr %s415, 4
        %s417 = scalar_lea.vmem %s0, %s416
        %p418 = pneg %p49
        %p419 = pneg %p46
        %s420 = smul.u32 8, %s28
        %p421 = scmp.lt.s32.totalorder %s420, 31
        %s422 = scalar_select %p421, %s420, 31
        %s423 = smul.addr %s422, 8
        %s424 = scalar_lea.vmem %s1, %s423
        %p425 = pneg %p75
        %p426 = pneg %p72
        %p427 = pneg %p96
        %p428 = pneg %p93
        %p429 = pneg %p117
        %p430 = pneg %p114
        %p431 = pneg %p138
        %p432 = pneg %p135
        %p433 = pneg %p159
        %p434 = pneg %p156
        %p435 = pneg %p180
        %p436 = pneg %p177
        %p437 = pneg %p201
        %p438 = pneg %p198
        %p439 = pneg %p222
        %p440 = pneg %p219
        %p441 = pneg %p243
        %p442 = pneg %p240
        %p443 = pneg %p264
        %p444 = pneg %p261
        %p445 = pneg %p285
        %p446 = pneg %p282
        %p447 = pneg %p311
        %p448 = pneg %p308
        %s449 = sand.u32 %s298, 1
        %s450 = scalar_lea.sflag [#allocation3], %s449
        %s451 = sand.u32 %s298, 1
        %s452 = smul.addr %s451, 64
        %s453 = scalar_lea.vmem [#allocation2], %s452
        %p454 = pneg %p337
        %p455 = pneg %p334
        %s456 = smul.u32 8, %s28
        %p457 = scmp.lt.s32.totalorder %s456, 31
        %s458 = scalar_select %p457, %s456, 31
        %s459 = smul.addr %s458, 8
        %s460 = scalar_lea.vmem %s13, %s459
        %s461 = smul.u32 8, %s28
        %p462 = scmp.lt.s32.totalorder %s461, 31
        %s463 = scalar_select %p462, %s461, 31
        %s464 = smul.addr %s463, 2
        %s465 = smul.addr %s464, 4
        %s466 = scalar_lea.vmem %s0, %s465
        %s467 = smul.u32 8, %s28
        %s468 = smul.u32 8, %s28
        %p469 = scmp.lt.s32.totalorder %s468, 31
        %s470 = scalar_select %p469, %s468, 31
        %s471 = smul.addr %s470, 8
        %s472 = scalar_lea.vmem %s1, %s471
        %s473 = smul.u32 8, %s28
        %s474 = smul.u32 8, %s28
        %s475 = smul.u32 8, %s28
        %p476 = scmp.lt.s32.totalorder %s475, 31
        %s477 = scalar_select %p476, %s475, 31
        %s478 = smul.addr %s477, 8
        %s479 = scalar_lea.vmem %s13, %s478
        %s480 = smul.u32 8, %s28
        %v482 = vld [vmem:[%s466] sm:$0xff]
        %v483 = vld [vmem:[%s466 + $0x8] sm:$0xff]
        %v484 = vld [vmem:[%s466 + $0x10] sm:$0xff]
        %v485 = vld [vmem:[%s466 + $0x18] sm:$0xff]
        %v486 = vld [vmem:[%s466 + $0x20] sm:$0xff]
        %v487 = vld [vmem:[%s466 + $0x28] sm:$0xff]
        %v488 = vld [vmem:[%s466 + $0x30] sm:$0xff]
        %v489 = vld [vmem:[%s466 + $0x38] sm:$0xff]
        %v490 = vld [vmem:[%s472] sm:$0xff]
        %v491 = vld [vmem:[%s472 + $0x8] sm:$0xff]
        %v492 = vld [vmem:[%s472 + $0x10] sm:$0xff]
        %v493 = vld [vmem:[%s472 + $0x18] sm:$0xff]
        %v494 = vld [vmem:[%s472 + $0x20] sm:$0xff]
        %v495 = vld [vmem:[%s472 + $0x28] sm:$0xff]
        %v496 = vld [vmem:[%s472 + $0x30] sm:$0xff]
        %v497 = vld [vmem:[%s472 + $0x38] sm:$0xff]
        %v498 = vld [vmem:[%s2] sm:$0xf]
        %v499 = vld [vmem:[%s2 + $0x4] sm:$0xf]
        %v500 = vld [vmem:[%s2 + $0x8] sm:$0xf]
        %v501 = vld [vmem:[%s2 + $0xc] sm:$0xf]
        %v502 = vld [vmem:[%s2 + $0x10] sm:$0xf]
        %v503 = vld [vmem:[%s2 + $0x14] sm:$0xf]
        %v504 = vld [vmem:[%s2 + $0x18] sm:$0xf]
        %v505 = vld [vmem:[%s2 + $0x1c] sm:$0xf]
        %v506 = vld [vmem:[%s2 + $0x20] sm:$0xf]
        %v507 = vld [vmem:[%s2 + $0x24] sm:$0xf]
        %v508 = vld [vmem:[%s2 + $0x28] sm:$0xf]
        %v509 = vld [vmem:[%s2 + $0x2c] sm:$0xf]
        %v510 = vld [vmem:[%s2 + $0x30] sm:$0xf]
        %v511 = vld [vmem:[%s2 + $0x34] sm:$0xf]
        %v512 = vld [vmem:[%s2 + $0x38] sm:$0xf]
        %v513 = vld [vmem:[%s2 + $0x3c] sm:$0xf]
        %v514 = vld [vmem:[%s2 + $0x40] sm:$0xf]
        %v515 = vld [vmem:[%s2 + $0x44] sm:$0xf]
        %v516 = vld [vmem:[%s2 + $0x48] sm:$0xf]
        %v517 = vld [vmem:[%s2 + $0x4c] sm:$0xf]
        %v518 = vld [vmem:[%s2 + $0x50] sm:$0xf]
        %v519 = vld [vmem:[%s2 + $0x54] sm:$0xf]
        %v520 = vld [vmem:[%s2 + $0x58] sm:$0xf]
        %v521 = vld [vmem:[%s2 + $0x5c] sm:$0xf]
        %v522 = vld [vmem:[%s2 + $0x60] sm:$0xf]
        %v523 = vld [vmem:[%s2 + $0x64] sm:$0xf]
        %v524 = vld [vmem:[%s2 + $0x68] sm:$0xf]
        %v525 = vld [vmem:[%s2 + $0x6c] sm:$0xf]
        %v526 = vld [vmem:[%s2 + $0x70] sm:$0xf]
        %v527 = vld [vmem:[%s2 + $0x74] sm:$0xf]
        %v528 = vld [vmem:[%s2 + $0x78] sm:$0xf]
        %v529 = vld [vmem:[%s2 + $0x7c] sm:$0xf]
        %v530 = vld [vmem:[%s3] sm:$0x1]
        %v532 = vperm.slane %v530, 0
        %v542 = vunpack.c.l.b16 %v482
        %v543 = vunpack.c.h.b16 %v482
        %v544 = vunpack.c.l.b16 %v483
        %v545 = vunpack.c.h.b16 %v483
        %v546 = vunpack.c.l.b16 %v484
        %v547 = vunpack.c.h.b16 %v484
        %v548 = vunpack.c.l.b16 %v485
        %v549 = vunpack.c.h.b16 %v485
        %v550 = vunpack.c.l.b16 %v486
        %v551 = vunpack.c.h.b16 %v486
        %v552 = vunpack.c.l.b16 %v487
        %v553 = vunpack.c.h.b16 %v487
        %v554 = vunpack.c.l.b16 %v488
        %v555 = vunpack.c.h.b16 %v488
        %v556 = vunpack.c.l.b16 %v489
        %v557 = vunpack.c.h.b16 %v489
        %v558 = vpack.c.b16 %v544, %v542
        %v559 = vpack.c.b16 %v545, %v543
        %v560 = vpack.c.b16 %v548, %v546
        %v561 = vpack.c.b16 %v549, %v547
        %v562 = vpack.c.b16 %v552, %v550
        %v563 = vpack.c.b16 %v553, %v551
        %v564 = vpack.c.b16 %v556, %v554
        %v565 = vpack.c.b16 %v557, %v555
        %v606 = vunpack.c.l.b16 %v498
        %v607 = vunpack.c.l.b16 %v499
        %v608 = vunpack.c.l.b16 %v500
        %v609 = vunpack.c.l.b16 %v501
        %v610 = vunpack.c.l.b16 %v502
        %v611 = vunpack.c.l.b16 %v503
        %v612 = vunpack.c.l.b16 %v504
        %v613 = vunpack.c.l.b16 %v505
        %v614 = vunpack.c.l.b16 %v506
        %v615 = vunpack.c.l.b16 %v507
        %v616 = vunpack.c.l.b16 %v508
        %v617 = vunpack.c.l.b16 %v509
        %v618 = vunpack.c.l.b16 %v510
        %v619 = vunpack.c.l.b16 %v511
        %v620 = vunpack.c.l.b16 %v512
        %v621 = vunpack.c.l.b16 %v513
        %v622 = vunpack.c.l.b16 %v514
        %v623 = vunpack.c.l.b16 %v515
        %v624 = vunpack.c.l.b16 %v516
        %v625 = vunpack.c.l.b16 %v517
        %v626 = vunpack.c.l.b16 %v518
        %v627 = vunpack.c.l.b16 %v519
        %v628 = vunpack.c.l.b16 %v520
        %v629 = vunpack.c.l.b16 %v521
        %v630 = vunpack.c.l.b16 %v522
        %v631 = vunpack.c.l.b16 %v523
        %v632 = vunpack.c.l.b16 %v524
        %v633 = vunpack.c.l.b16 %v525
        %v634 = vunpack.c.l.b16 %v526
        %v635 = vunpack.c.l.b16 %v527
        %v636 = vunpack.c.l.b16 %v528
        %v637 = vunpack.c.l.b16 %v529
        %v638 = vpack.c.b16 %v607, %v606
        %v639 = vpack.c.b16 %v609, %v608
        %v640 = vpack.c.b16 %v611, %v610
        %v641 = vpack.c.b16 %v613, %v612
        %v642 = vpack.c.b16 %v615, %v614
        %v643 = vpack.c.b16 %v617, %v616
        %v644 = vpack.c.b16 %v619, %v618
        %v645 = vpack.c.b16 %v621, %v620
        %v646 = vpack.c.b16 %v623, %v622
        %v647 = vpack.c.b16 %v625, %v624
        %v648 = vpack.c.b16 %v627, %v626
        %v649 = vpack.c.b16 %v629, %v628
        %v650 = vpack.c.b16 %v631, %v630
        %v651 = vpack.c.b16 %v633, %v632
        %v652 = vpack.c.b16 %v635, %v634
        %v653 = vpack.c.b16 %v637, %v636
        %670 = vmatpush.bf16.msra.mxu0 %v645
        %671 = vmatpush.bf16.msra.mxu0 %v644
        %672 = vmatpush.bf16.msra.mxu0 %v643
        %673 = vmatpush.bf16.msra.mxu0 %v642
        %674 = vmatpush.bf16.msra.mxu0 %v641
        %675 = vmatpush.bf16.msra.mxu0 %v640
        %676 = vmatpush.bf16.msra.mxu0 %v639
        %677 = vmatpush.bf16.msra.mxu0 %v638
        %678 = vmatmul.bf16.gmra.mxu0 %v558
        %v679 = vpop.f32.mrf.mxu0
        %v680 = vadd.f32 %v532, %v679
        %v681 = vpop.f32.mrf.mxu0
        %v682 = vadd.f32 %v532, %v681
        %683 = vmatmul.bf16.gmra.mxu0 %v560
        %v684 = vpop.f32.mrf.mxu0
        %v685 = vadd.f32 %v532, %v684
        %v686 = vpop.f32.mrf.mxu0
        %v687 = vadd.f32 %v532, %v686
        %688 = vmatmul.bf16.gmra.mxu0 %v562
        %v689 = vpop.f32.mrf.mxu0
        %v690 = vadd.f32 %v532, %v689
        %v691 = vpop.f32.mrf.mxu0
        %v692 = vadd.f32 %v532, %v691
        %693 = vmatmul.bf16.gmra.mxu0 %v564
        %v694 = vpop.f32.mrf.mxu0
        %v695 = vadd.f32 %v532, %v694
        %v696 = vpop.f32.mrf.mxu0
        %v697 = vadd.f32 %v532, %v696
        %698 = vdwg.mxu0
        %699 = vmatpush.bf16.msra.mxu0 %v653
        %700 = vmatpush.bf16.msra.mxu0 %v652
        %701 = vmatpush.bf16.msra.mxu0 %v651
        %702 = vmatpush.bf16.msra.mxu0 %v650
        %703 = vmatpush.bf16.msra.mxu0 %v649
        %704 = vmatpush.bf16.msra.mxu0 %v648
        %705 = vmatpush.bf16.msra.mxu0 %v647
        %706 = vmatpush.bf16.msra.mxu0 %v646
        %707 = vmatmul.bf16.gmra.mxu0 %v559
        %v708 = vpop.f32.mrf.mxu0
        %v709 = vadd.f32 %v680, %v708
        %v710 = vpop.f32.mrf.mxu0
        %v711 = vadd.f32 %v682, %v710
        %712 = vmatmul.bf16.gmra.mxu0 %v561
        %v713 = vpop.f32.mrf.mxu0
        %v714 = vadd.f32 %v685, %v713
        %v715 = vpop.f32.mrf.mxu0
        %v716 = vadd.f32 %v687, %v715
        %717 = vmatmul.bf16.gmra.mxu0 %v563
        %v718 = vpop.f32.mrf.mxu0
        %v719 = vadd.f32 %v690, %v718
        %v720 = vpop.f32.mrf.mxu0
        %v721 = vadd.f32 %v692, %v720
        %722 = vmatmul.bf16.gmra.mxu0 %v565
        %v723 = vpop.f32.mrf.mxu0
        %v724 = vadd.f32 %v695, %v723
        %v725 = vpop.f32.mrf.mxu0
        %v726 = vadd.f32 %v697, %v725
        %727 = vdwg.mxu0
        %v728 = vmax.f32 %v709, 0.0
        %v729 = vmax.f32 %v711, 0.0
        %v730 = vmax.f32 %v714, 0.0
        %v731 = vmax.f32 %v716, 0.0
        %v732 = vmax.f32 %v719, 0.0
        %v733 = vmax.f32 %v721, 0.0
        %v734 = vmax.f32 %v724, 0.0
        %v735 = vmax.f32 %v726, 0.0
        %v736 = vand.u32 2147483647, %v709
        %v737 = vand.u32 2147483647, %v711
        %v738 = vand.u32 2147483647, %v714
        %v739 = vand.u32 2147483647, %v716
        %v740 = vand.u32 2147483647, %v719
        %v741 = vand.u32 2147483647, %v721
        %v742 = vand.u32 2147483647, %v724
        %v743 = vand.u32 2147483647, %v726
        %v744 = vsub.f32 0.0, %v736
        %v745 = vsub.f32 0.0, %v737
        %v746 = vsub.f32 0.0, %v738
        %v747 = vsub.f32 0.0, %v739
        %v748 = vsub.f32 0.0, %v740
        %v749 = vsub.f32 0.0, %v741
        %v750 = vsub.f32 0.0, %v742
        %v751 = vsub.f32 0.0, %v743
        %v752 = vmul.f32 %v744, 1.442695
        %v753 = vpow.pop %v752
        %v754 = vmul.f32 %v745, 1.442695
        %v755 = vpow.pop %v754
        %v756 = vmul.f32 %v746, 1.442695
        %v757 = vpow.pop %v756
        %v758 = vmul.f32 %v747, 1.442695
        %v759 = vpow.pop %v758
        %v760 = vmul.f32 %v748, 1.442695
        %v761 = vpow.pop %v760
        %v762 = vmul.f32 %v749, 1.442695
        %v763 = vpow.pop %v762
        %v764 = vmul.f32 %v750, 1.442695
        %v765 = vpow.pop %v764
        %v766 = vmul.f32 %v751, 1.442695
        %v767 = vpow.pop %v766
        %v768 = vadd.f32 %v753, 1.0
        %v769 = vlog2.pop %v768
        %v770 = vmul.f32 %v769, 0.6931472
        %v771 = vmul.f32 -0.5, %v753
        %v772 = vadd.f32 %v771, 1.0
        %v773 = vmul.f32 %v772, %v753
        %v774 = vand.u32 2147483647, %v753
        %vm775 = vcmp.lt.f32.partialorder %v774, 0.0004427343
        %v776 = vsel %vm775, %v773, %v770
        %v777 = vadd.f32 %v755, 1.0
        %v778 = vlog2.pop %v777
        %v779 = vmul.f32 %v778, 0.6931472
        %v780 = vmul.f32 -0.5, %v755
        %v781 = vadd.f32 %v780, 1.0
        %v782 = vmul.f32 %v781, %v755
        %v783 = vand.u32 2147483647, %v755
        %vm784 = vcmp.lt.f32.partialorder %v783, 0.0004427343
        %v785 = vsel %vm784, %v782, %v779
        %v786 = vadd.f32 %v757, 1.0
        %v787 = vlog2.pop %v786
        %v788 = vmul.f32 %v787, 0.6931472
        %v789 = vmul.f32 -0.5, %v757
        %v790 = vadd.f32 %v789, 1.0
        %v791 = vmul.f32 %v790, %v757
        %v792 = vand.u32 2147483647, %v757
        %vm793 = vcmp.lt.f32.partialorder %v792, 0.0004427343
        %v794 = vsel %vm793, %v791, %v788
        %v795 = vadd.f32 %v759, 1.0
        %v796 = vlog2.pop %v795
        %v797 = vmul.f32 %v796, 0.6931472
        %v798 = vmul.f32 -0.5, %v759
        %v799 = vadd.f32 %v798, 1.0
        %v800 = vmul.f32 %v799, %v759
        %v801 = vand.u32 2147483647, %v759
        %vm802 = vcmp.lt.f32.partialorder %v801, 0.0004427343
        %v803 = vsel %vm802, %v800, %v797
        %v804 = vadd.f32 %v761, 1.0
        %v805 = vlog2.pop %v804
        %v806 = vmul.f32 %v805, 0.6931472
        %v807 = vmul.f32 -0.5, %v761
        %v808 = vadd.f32 %v807, 1.0
        %v809 = vmul.f32 %v808, %v761
        %v810 = vand.u32 2147483647, %v761
        %vm811 = vcmp.lt.f32.partialorder %v810, 0.0004427343
        %v812 = vsel %vm811, %v809, %v806
        %v813 = vadd.f32 %v763, 1.0
        %v814 = vlog2.pop %v813
        %v815 = vmul.f32 %v814, 0.6931472
        %v816 = vmul.f32 -0.5, %v763
        %v817 = vadd.f32 %v816, 1.0
        %v818 = vmul.f32 %v817, %v763
        %v819 = vand.u32 2147483647, %v763
        %vm820 = vcmp.lt.f32.partialorder %v819, 0.0004427343
        %v821 = vsel %vm820, %v818, %v815
        %v822 = vadd.f32 %v765, 1.0
        %v823 = vlog2.pop %v822
        %v824 = vmul.f32 %v823, 0.6931472
        %v825 = vmul.f32 -0.5, %v765
        %v826 = vadd.f32 %v825, 1.0
        %v827 = vmul.f32 %v826, %v765
        %v828 = vand.u32 2147483647, %v765
        %vm829 = vcmp.lt.f32.partialorder %v828, 0.0004427343
        %v830 = vsel %vm829, %v827, %v824
        %v831 = vadd.f32 %v767, 1.0
        %v832 = vlog2.pop %v831
        %v833 = vmul.f32 %v832, 0.6931472
        %v834 = vmul.f32 -0.5, %v767
        %v835 = vadd.f32 %v834, 1.0
        %v836 = vmul.f32 %v835, %v767
        %v837 = vand.u32 2147483647, %v767
        %vm838 = vcmp.lt.f32.partialorder %v837, 0.0004427343
        %v839 = vsel %vm838, %v836, %v833
        %v840 = vadd.f32 %v728, %v776
        %v841 = vadd.f32 %v729, %v785
        %v842 = vadd.f32 %v730, %v794
        %v843 = vadd.f32 %v731, %v803
        %v844 = vadd.f32 %v732, %v812
        %v845 = vadd.f32 %v733, %v821
        %v846 = vadd.f32 %v734, %v830
        %v847 = vadd.f32 %v735, %v839
        %v848 = vpack.c.bf16 %v841, %v840
        %v849 = vpack.c.bf16 %v843, %v842
        %v850 = vpack.c.bf16 %v845, %v844
        %v851 = vpack.c.bf16 %v847, %v846
        %v852 = vld [vmem:[%s4] sm:$0xf]
        %v853 = vld [vmem:[%s4 + $0x4] sm:$0xf]
        %v854 = vld [vmem:[%s4 + $0x8] sm:$0xf]
        %v855 = vld [vmem:[%s4 + $0xc] sm:$0xf]
        %v856 = vld [vmem:[%s4 + $0x10] sm:$0xf]
        %v857 = vld [vmem:[%s4 + $0x14] sm:$0xf]
        %v858 = vld [vmem:[%s4 + $0x18] sm:$0xf]
        %v859 = vld [vmem:[%s4 + $0x1c] sm:$0xf]
        %v860 = vld [vmem:[%s4 + $0x20] sm:$0xf]
        %v861 = vld [vmem:[%s4 + $0x24] sm:$0xf]
        %v862 = vld [vmem:[%s4 + $0x28] sm:$0xf]
        %v863 = vld [vmem:[%s4 + $0x2c] sm:$0xf]
        %v864 = vld [vmem:[%s4 + $0x30] sm:$0xf]
        %v865 = vld [vmem:[%s4 + $0x34] sm:$0xf]
        %v866 = vld [vmem:[%s4 + $0x38] sm:$0xf]
        %v867 = vld [vmem:[%s4 + $0x3c] sm:$0xf]
        %v868 = vld [vmem:[%s5] sm:$0x1]
        %v870 = vperm.slane %v868, 0
        %v888 = vunpack.c.l.b16 %v852
        %v889 = vunpack.c.l.b16 %v853
        %v890 = vunpack.c.l.b16 %v854
        %v891 = vunpack.c.l.b16 %v855
        %v892 = vunpack.c.l.b16 %v856
        %v893 = vunpack.c.l.b16 %v857
        %v894 = vunpack.c.l.b16 %v858
        %v895 = vunpack.c.l.b16 %v859
        %v896 = vunpack.c.l.b16 %v860
        %v897 = vunpack.c.l.b16 %v861
        %v898 = vunpack.c.l.b16 %v862
        %v899 = vunpack.c.l.b16 %v863
        %v900 = vunpack.c.l.b16 %v864
        %v901 = vunpack.c.l.b16 %v865
        %v902 = vunpack.c.l.b16 %v866
        %v903 = vunpack.c.l.b16 %v867
        %v904 = vpack.c.b16 %v889, %v888
        %v905 = vpack.c.b16 %v891, %v890
        %v906 = vpack.c.b16 %v893, %v892
        %v907 = vpack.c.b16 %v895, %v894
        %v908 = vpack.c.b16 %v897, %v896
        %v909 = vpack.c.b16 %v899, %v898
        %v910 = vpack.c.b16 %v901, %v900
        %v911 = vpack.c.b16 %v903, %v902
        %920 = vmatpush.bf16.msra.mxu0 %v911
        %921 = vmatpush.bf16.msra.mxu0 %v910
        %922 = vmatpush.bf16.msra.mxu0 %v909
        %923 = vmatpush.bf16.msra.mxu0 %v908
        %924 = vmatpush.bf16.msra.mxu0 %v907
        %925 = vmatpush.bf16.msra.mxu0 %v906
        %926 = vmatpush.bf16.msra.mxu0 %v905
        %927 = vmatpush.bf16.msra.mxu0 %v904
        %928 = vmatmul.bf16.gmra.mxu0 %v848
        %v929 = vpop.f32.mrf.mxu0
        %v930 = vadd.f32 %v870, %v929
        %v931 = vpop.f32.mrf.mxu0
        %v932 = vadd.f32 %v870, %v931
        %933 = vmatmul.bf16.gmra.mxu0 %v849
        %v934 = vpop.f32.mrf.mxu0
        %v935 = vadd.f32 %v870, %v934
        %v936 = vpop.f32.mrf.mxu0
        %v937 = vadd.f32 %v870, %v936
        %938 = vmatmul.bf16.gmra.mxu0 %v850
        %v939 = vpop.f32.mrf.mxu0
        %v940 = vadd.f32 %v870, %v939
        %v941 = vpop.f32.mrf.mxu0
        %v942 = vadd.f32 %v870, %v941
        %943 = vmatmul.bf16.gmra.mxu0 %v851
        %v944 = vpop.f32.mrf.mxu0
        %v945 = vadd.f32 %v870, %v944
        %v946 = vpop.f32.mrf.mxu0
        %v947 = vadd.f32 %v870, %v946
        %948 = vdwg.mxu0
        %v949 = vmax.f32 %v930, 0.0
        %v950 = vmax.f32 %v932, 0.0
        %v951 = vmax.f32 %v935, 0.0
        %v952 = vmax.f32 %v937, 0.0
        %v953 = vmax.f32 %v940, 0.0
        %v954 = vmax.f32 %v942, 0.0
        %v955 = vmax.f32 %v945, 0.0
        %v956 = vmax.f32 %v947, 0.0
        %v957 = vand.u32 2147483647, %v930
        %v958 = vand.u32 2147483647, %v932
        %v959 = vand.u32 2147483647, %v935
        %v960 = vand.u32 2147483647, %v937
        %v961 = vand.u32 2147483647, %v940
        %v962 = vand.u32 2147483647, %v942
        %v963 = vand.u32 2147483647, %v945
        %v964 = vand.u32 2147483647, %v947
        %v965 = vsub.f32 0.0, %v957
        %v966 = vsub.f32 0.0, %v958
        %v967 = vsub.f32 0.0, %v959
        %v968 = vsub.f32 0.0, %v960
        %v969 = vsub.f32 0.0, %v961
        %v970 = vsub.f32 0.0, %v962
        %v971 = vsub.f32 0.0, %v963
        %v972 = vsub.f32 0.0, %v964
        %v973 = vmul.f32 %v965, 1.442695
        %v974 = vpow.pop %v973
        %v975 = vmul.f32 %v966, 1.442695
        %v976 = vpow.pop %v975
        %v977 = vmul.f32 %v967, 1.442695
        %v978 = vpow.pop %v977
        %v979 = vmul.f32 %v968, 1.442695
        %v980 = vpow.pop %v979
        %v981 = vmul.f32 %v969, 1.442695
        %v982 = vpow.pop %v981
        %v983 = vmul.f32 %v970, 1.442695
        %v984 = vpow.pop %v983
        %v985 = vmul.f32 %v971, 1.442695
        %v986 = vpow.pop %v985
        %v987 = vmul.f32 %v972, 1.442695
        %v988 = vpow.pop %v987
        %v989 = vadd.f32 %v974, 1.0
        %v990 = vlog2.pop %v989
        %v991 = vmul.f32 %v990, 0.6931472
        %v992 = vmul.f32 -0.5, %v974
        %v993 = vadd.f32 %v992, 1.0
        %v994 = vmul.f32 %v993, %v974
        %v995 = vand.u32 2147483647, %v974
        %vm996 = vcmp.lt.f32.partialorder %v995, 0.0004427343
        %v997 = vsel %vm996, %v994, %v991
        %v998 = vadd.f32 %v976, 1.0
        %v999 = vlog2.pop %v998
        %v1000 = vmul.f32 %v999, 0.6931472
        %v1001 = vmul.f32 -0.5, %v976
        %v1002 = vadd.f32 %v1001, 1.0
        %v1003 = vmul.f32 %v1002, %v976
        %v1004 = vand.u32 2147483647, %v976
        %vm1005 = vcmp.lt.f32.partialorder %v1004, 0.0004427343
        %v1006 = vsel %vm1005, %v1003, %v1000
        %v1007 = vadd.f32 %v978, 1.0
        %v1008 = vlog2.pop %v1007
        %v1009 = vmul.f32 %v1008, 0.6931472
        %v1010 = vmul.f32 -0.5, %v978
        %v1011 = vadd.f32 %v1010, 1.0
        %v1012 = vmul.f32 %v1011, %v978
        %v1013 = vand.u32 2147483647, %v978
        %vm1014 = vcmp.lt.f32.partialorder %v1013, 0.0004427343
        %v1015 = vsel %vm1014, %v1012, %v1009
        %v1016 = vadd.f32 %v980, 1.0
        %v1017 = vlog2.pop %v1016
        %v1018 = vmul.f32 %v1017, 0.6931472
        %v1019 = vmul.f32 -0.5, %v980
        %v1020 = vadd.f32 %v1019, 1.0
        %v1021 = vmul.f32 %v1020, %v980
        %v1022 = vand.u32 2147483647, %v980
        %vm1023 = vcmp.lt.f32.partialorder %v1022, 0.0004427343
        %v1024 = vsel %vm1023, %v1021, %v1018
        %v1025 = vadd.f32 %v982, 1.0
        %v1026 = vlog2.pop %v1025
        %v1027 = vmul.f32 %v1026, 0.6931472
        %v1028 = vmul.f32 -0.5, %v982
        %v1029 = vadd.f32 %v1028, 1.0
        %v1030 = vmul.f32 %v1029, %v982
        %v1031 = vand.u32 2147483647, %v982
        %vm1032 = vcmp.lt.f32.partialorder %v1031, 0.0004427343
        %v1033 = vsel %vm1032, %v1030, %v1027
        %v1034 = vadd.f32 %v984, 1.0
        %v1035 = vlog2.pop %v1034
        %v1036 = vmul.f32 %v1035, 0.6931472
        %v1037 = vmul.f32 -0.5, %v984
        %v1038 = vadd.f32 %v1037, 1.0
        %v1039 = vmul.f32 %v1038, %v984
        %v1040 = vand.u32 2147483647, %v984
        %vm1041 = vcmp.lt.f32.partialorder %v1040, 0.0004427343
        %v1042 = vsel %vm1041, %v1039, %v1036
        %v1043 = vadd.f32 %v986, 1.0
        %v1044 = vlog2.pop %v1043
        %v1045 = vmul.f32 %v1044, 0.6931472
        %v1046 = vmul.f32 -0.5, %v986
        %v1047 = vadd.f32 %v1046, 1.0
        %v1048 = vmul.f32 %v1047, %v986
        %v1049 = vand.u32 2147483647, %v986
        %vm1050 = vcmp.lt.f32.partialorder %v1049, 0.0004427343
        %v1051 = vsel %vm1050, %v1048, %v1045
        %v1052 = vadd.f32 %v988, 1.0
        %v1053 = vlog2.pop %v1052
        %v1054 = vmul.f32 %v1053, 0.6931472
        %v1055 = vmul.f32 -0.5, %v988
        %v1056 = vadd.f32 %v1055, 1.0
        %v1057 = vmul.f32 %v1056, %v988
        %v1058 = vand.u32 2147483647, %v988
        %vm1059 = vcmp.lt.f32.partialorder %v1058, 0.0004427343
        %v1060 = vsel %vm1059, %v1057, %v1054
        %v1061 = vadd.f32 %v949, %v997
        %v1062 = vadd.f32 %v950, %v1006
        %v1063 = vadd.f32 %v951, %v1015
        %v1064 = vadd.f32 %v952, %v1024
        %v1065 = vadd.f32 %v953, %v1033
        %v1066 = vadd.f32 %v954, %v1042
        %v1067 = vadd.f32 %v955, %v1051
        %v1068 = vadd.f32 %v956, %v1060
        %v1069 = vpack.c.bf16 %v1062, %v1061
        %v1070 = vpack.c.bf16 %v1064, %v1063
        %v1071 = vpack.c.bf16 %v1066, %v1065
        %v1072 = vpack.c.bf16 %v1068, %v1067
        %v1073 = vld [vmem:[%s6] sm:$0xf]
        %v1074 = vld [vmem:[%s6 + $0x4] sm:$0xf]
        %v1075 = vld [vmem:[%s6 + $0x8] sm:$0xf]
        %v1076 = vld [vmem:[%s6 + $0xc] sm:$0xf]
        %v1077 = vld [vmem:[%s6 + $0x10] sm:$0xf]
        %v1078 = vld [vmem:[%s6 + $0x14] sm:$0xf]
        %v1079 = vld [vmem:[%s6 + $0x18] sm:$0xf]
        %v1080 = vld [vmem:[%s6 + $0x1c] sm:$0xf]
        %v1081 = vld [vmem:[%s7] sm:$0x1]
        %v1083 = vperm.slane %v1081, 0
        %v1093 = vunpack.c.l.b16 %v1073
        %v1094 = vunpack.c.l.b16 %v1074
        %v1095 = vunpack.c.l.b16 %v1075
        %v1096 = vunpack.c.l.b16 %v1076
        %v1097 = vunpack.c.l.b16 %v1077
        %v1098 = vunpack.c.l.b16 %v1078
        %v1099 = vunpack.c.l.b16 %v1079
        %v1100 = vunpack.c.l.b16 %v1080
        %v1101 = vpack.c.b16 %v1094, %v1093
        %v1102 = vpack.c.b16 %v1096, %v1095
        %v1103 = vpack.c.b16 %v1098, %v1097
        %v1104 = vpack.c.b16 %v1100, %v1099
        %vm1109 = vcmask 523264
        %v1111 = vsel %vm1109, %v1069, 0
        %v1114 = vsel %vm1109, %v1070, 0
        %v1117 = vsel %vm1109, %v1071, 0
        %v1120 = vsel %vm1109, %v1072, 0
        %1122 = vmatpush.bf16.msra.mxu0 0
        %1123 = vmatpush.bf16.msra.mxu0 0
        %1124 = vmatpush.bf16.msra.mxu0 0
        %1125 = vmatpush.bf16.msra.mxu0 0
        %1126 = vmatpush.bf16.msra.mxu0 %v1104
        %1127 = vmatpush.bf16.msra.mxu0 %v1103
        %1128 = vmatpush.bf16.msra.mxu0 %v1102
        %1129 = vmatpush.bf16.msra.mxu0 %v1101
        %1130 = vmatmul.bf16.gmra.mxu0 %v1111
        %v1131 = vpop.f32.mrf.mxu0
        %v1132 = vadd.f32 %v1083, %v1131
        %v1133 = vpop.f32.mrf.mxu0
        %v1134 = vadd.f32 %v1083, %v1133
        %1135 = vmatmul.bf16.gmra.mxu0 %v1114
        %v1136 = vpop.f32.mrf.mxu0
        %v1137 = vadd.f32 %v1083, %v1136
        %v1138 = vpop.f32.mrf.mxu0
        %v1139 = vadd.f32 %v1083, %v1138
        %1140 = vmatmul.bf16.gmra.mxu0 %v1117
        %v1141 = vpop.f32.mrf.mxu0
        %v1142 = vadd.f32 %v1083, %v1141
        %v1143 = vpop.f32.mrf.mxu0
        %v1144 = vadd.f32 %v1083, %v1143
        %1145 = vmatmul.bf16.gmra.mxu0 %v1120
        %v1146 = vpop.f32.mrf.mxu0
        %v1147 = vadd.f32 %v1083, %v1146
        %v1148 = vpop.f32.mrf.mxu0
        %v1149 = vadd.f32 %v1083, %v1148
        %1150 = vdwg.mxu0
        %v1151 = vld [vmem:[%s8] sm:$0xf]
        %v1152 = vld [vmem:[%s8 + $0x4] sm:$0xf]
        %v1153 = vld [vmem:[%s8 + $0x8] sm:$0xf]
        %v1154 = vld [vmem:[%s8 + $0xc] sm:$0xf]
        %v1155 = vld [vmem:[%s8 + $0x10] sm:$0xf]
        %v1156 = vld [vmem:[%s8 + $0x14] sm:$0xf]
        %v1157 = vld [vmem:[%s8 + $0x18] sm:$0xf]
        %v1158 = vld [vmem:[%s8 + $0x1c] sm:$0xf]
        %v1159 = vld [vmem:[%s9] sm:$0x1]
        %v1161 = vperm.slane %v1159, 0
        %v1171 = vunpack.c.l.b16 %v1151
        %v1172 = vunpack.c.l.b16 %v1152
        %v1173 = vunpack.c.l.b16 %v1153
        %v1174 = vunpack.c.l.b16 %v1154
        %v1175 = vunpack.c.l.b16 %v1155
        %v1176 = vunpack.c.l.b16 %v1156
        %v1177 = vunpack.c.l.b16 %v1157
        %v1178 = vunpack.c.l.b16 %v1158
        %v1179 = vpack.c.b16 %v1172, %v1171
        %v1180 = vpack.c.b16 %v1174, %v1173
        %v1181 = vpack.c.b16 %v1176, %v1175
        %v1182 = vpack.c.b16 %v1178, %v1177
        %1187 = vmatpush.bf16.msra.mxu0 0
        %1188 = vmatpush.bf16.msra.mxu0 0
        %1189 = vmatpush.bf16.msra.mxu0 0
        %1190 = vmatpush.bf16.msra.mxu0 0
        %1191 = vmatpush.bf16.msra.mxu0 %v1182
        %1192 = vmatpush.bf16.msra.mxu0 %v1181
        %1193 = vmatpush.bf16.msra.mxu0 %v1180
        %1194 = vmatpush.bf16.msra.mxu0 %v1179
        %1195 = vmatmul.bf16.gmra.mxu0 %v1111
        %v1196 = vpop.f32.mrf.mxu0
        %v1197 = vadd.f32 %v1161, %v1196
        %v1198 = vpop.f32.mrf.mxu0
        %v1199 = vadd.f32 %v1161, %v1198
        %1200 = vmatmul.bf16.gmra.mxu0 %v1114
        %v1201 = vpop.f32.mrf.mxu0
        %v1202 = vadd.f32 %v1161, %v1201
        %v1203 = vpop.f32.mrf.mxu0
        %v1204 = vadd.f32 %v1161, %v1203
        %1205 = vmatmul.bf16.gmra.mxu0 %v1117
        %v1206 = vpop.f32.mrf.mxu0
        %v1207 = vadd.f32 %v1161, %v1206
        %v1208 = vpop.f32.mrf.mxu0
        %v1209 = vadd.f32 %v1161, %v1208
        %1210 = vmatmul.bf16.gmra.mxu0 %v1120
        %v1211 = vpop.f32.mrf.mxu0
        %v1212 = vadd.f32 %v1161, %v1211
        %v1213 = vpop.f32.mrf.mxu0
        %v1214 = vadd.f32 %v1161, %v1213
        %1215 = vdwg.mxu0
        %v1216 = vmul.f32 %v1197, 0.5
        %v1217 = vmul.f32 %v1199, 0.5
        %v1218 = vmul.f32 %v1202, 0.5
        %v1219 = vmul.f32 %v1204, 0.5
        %v1220 = vmul.f32 %v1207, 0.5
        %v1221 = vmul.f32 %v1209, 0.5
        %v1222 = vmul.f32 %v1212, 0.5
        %v1223 = vmul.f32 %v1214, 0.5
        %v1224 = vmul.f32 %v1216, 1.442695
        %v1225 = vpow.pop %v1224
        %v1226 = vmul.f32 %v1217, 1.442695
        %v1227 = vpow.pop %v1226
        %v1228 = vmul.f32 %v1218, 1.442695
        %v1229 = vpow.pop %v1228
        %v1230 = vmul.f32 %v1219, 1.442695
        %v1231 = vpow.pop %v1230
        %v1232 = vmul.f32 %v1220, 1.442695
        %v1233 = vpow.pop %v1232
        %v1234 = vmul.f32 %v1221, 1.442695
        %v1235 = vpow.pop %v1234
        %v1236 = vmul.f32 %v1222, 1.442695
        %v1237 = vpow.pop %v1236
        %v1238 = vmul.f32 %v1223, 1.442695
        %v1239 = vpow.pop %v1238
        %v1240 = vmul.f32 %v1225, %v490
        %v1241 = vmul.f32 %v1227, %v491
        %v1242 = vmul.f32 %v1229, %v492
        %v1243 = vmul.f32 %v1231, %v493
        %v1244 = vmul.f32 %v1233, %v494
        %v1245 = vmul.f32 %v1235, %v495
        %v1246 = vmul.f32 %v1237, %v496
        %v1247 = vmul.f32 %v1239, %v497
        %v1248 = vadd.f32 %v1132, %v1240
        %v1249 = vadd.f32 %v1134, %v1241
        %v1250 = vadd.f32 %v1137, %v1242
        %v1251 = vadd.f32 %v1139, %v1243
        %v1252 = vadd.f32 %v1142, %v1244
        %v1253 = vadd.f32 %v1144, %v1245
        %v1254 = vadd.f32 %v1147, %v1246
        %v1255 = vadd.f32 %v1149, %v1247
        %vm1256 = vcmask 261120
        %v1257 = vsel %vm1256, %v1248, -inf
        %1258 = vmax.xlane.f32.xlu0 %v1257
        %v1259 = vpop.xlane.xlu0 %1258
        %v1260 = vsel %vm1256, %v1249, -inf
        %1261 = vmax.xlane.f32.xlu0 %v1260
        %v1262 = vpop.xlane.xlu0 %1261
        %v1263 = vsel %vm1256, %v1250, -inf
        %1264 = vmax.xlane.f32.xlu0 %v1263
        %v1265 = vpop.xlane.xlu0 %1264
        %v1266 = vsel %vm1256, %v1251, -inf
        %1267 = vmax.xlane.f32.xlu0 %v1266
        %v1268 = vpop.xlane.xlu0 %1267
        %v1269 = vsel %vm1256, %v1252, -inf
        %1270 = vmax.xlane.f32.xlu0 %v1269
        %v1271 = vpop.xlane.xlu0 %1270
        %v1272 = vsel %vm1256, %v1253, -inf
        %1273 = vmax.xlane.f32.xlu0 %v1272
        %v1274 = vpop.xlane.xlu0 %1273
        %v1275 = vsel %vm1256, %v1254, -inf
        %1276 = vmax.xlane.f32.xlu0 %v1275
        %v1277 = vpop.xlane.xlu0 %1276
        %v1278 = vsel %vm1256, %v1255, -inf
        %1279 = vmax.xlane.f32.xlu0 %v1278
        %v1280 = vpop.xlane.xlu0 %1279
        %v1281 = vsub.f32 %v1248, %v1259
        %v1282 = vsub.f32 %v1249, %v1262
        %v1283 = vsub.f32 %v1250, %v1265
        %v1284 = vsub.f32 %v1251, %v1268
        %v1285 = vsub.f32 %v1252, %v1271
        %v1286 = vsub.f32 %v1253, %v1274
        %v1287 = vsub.f32 %v1254, %v1277
        %v1288 = vsub.f32 %v1255, %v1280
        %v1289 = vmul.f32 %v1281, 1.442695
        %v1290 = vpow.pop %v1289
        %v1291 = vmul.f32 %v1282, 1.442695
        %v1292 = vpow.pop %v1291
        %v1293 = vmul.f32 %v1283, 1.442695
        %v1294 = vpow.pop %v1293
        %v1295 = vmul.f32 %v1284, 1.442695
        %v1296 = vpow.pop %v1295
        %v1297 = vmul.f32 %v1285, 1.442695
        %v1298 = vpow.pop %v1297
        %v1299 = vmul.f32 %v1286, 1.442695
        %v1300 = vpow.pop %v1299
        %v1301 = vmul.f32 %v1287, 1.442695
        %v1302 = vpow.pop %v1301
        %v1303 = vmul.f32 %v1288, 1.442695
        %v1304 = vpow.pop %v1303
        %v1305 = vsel %vm1256, %v1290, 0.0
        %1306 = vadd.xlane.f32.xlu0 %v1305
        %v1307 = vpop.xlane.xlu0 %1306
        %v1308 = vsel %vm1256, %v1292, 0.0
        %1309 = vadd.xlane.f32.xlu0 %v1308
        %v1310 = vpop.xlane.xlu0 %1309
        %v1311 = vsel %vm1256, %v1294, 0.0
        %1312 = vadd.xlane.f32.xlu0 %v1311
        %v1313 = vpop.xlane.xlu0 %1312
        %v1314 = vsel %vm1256, %v1296, 0.0
        %1315 = vadd.xlane.f32.xlu0 %v1314
        %v1316 = vpop.xlane.xlu0 %1315
        %v1317 = vsel %vm1256, %v1298, 0.0
        %1318 = vadd.xlane.f32.xlu0 %v1317
        %v1319 = vpop.xlane.xlu0 %1318
        %v1320 = vsel %vm1256, %v1300, 0.0
        %1321 = vadd.xlane.f32.xlu0 %v1320
        %v1322 = vpop.xlane.xlu0 %1321
        %v1323 = vsel %vm1256, %v1302, 0.0
        %1324 = vadd.xlane.f32.xlu0 %v1323
        %v1325 = vpop.xlane.xlu0 %1324
        %v1326 = vsel %vm1256, %v1304, 0.0
        %1327 = vadd.xlane.f32.xlu0 %v1326
        %v1328 = vpop.xlane.xlu0 %1327
        %v1329 = vrcp.pop %v1307
        %v1330 = vmul.f32 %v1307, %v1329
        %v1331 = vsub.f32 1.0, %v1330
        %v1332 = vmul.f32 %v1329, %v1331
        %v1333 = vadd.f32 %v1329, %v1332
        %vm1334 = vweird.f32 %v1307
        %vm1335 = vweird.f32 %v1329
        %vm1336 = vmor %vm1334, %vm1335
        %v1337 = vsel %vm1336, %v1329, %v1333
        %v1338 = vand.u32 2147483647, %v1307
        %vm1339 = vcmp.eq.f32.partialorder %v1338, 8.507059e+37
        %v1340 = vand.u32 %v1307, 2147483648
        %v1341 = vor.u32 1.1754944e-38, %v1340
        %v1342 = vsel %vm1339, %v1341, %v1337
        %v1343 = vrcp.pop %v1310
        %v1344 = vmul.f32 %v1310, %v1343
        %v1345 = vsub.f32 1.0, %v1344
        %v1346 = vmul.f32 %v1343, %v1345
        %v1347 = vadd.f32 %v1343, %v1346
        %vm1348 = vweird.f32 %v1310
        %vm1349 = vweird.f32 %v1343
        %vm1350 = vmor %vm1348, %vm1349
        %v1351 = vsel %vm1350, %v1343, %v1347
        %v1352 = vand.u32 2147483647, %v1310
        %vm1353 = vcmp.eq.f32.partialorder %v1352, 8.507059e+37
        %v1354 = vand.u32 %v1310, 2147483648
        %v1355 = vor.u32 1.1754944e-38, %v1354
        %v1356 = vsel %vm1353, %v1355, %v1351
        %v1357 = vrcp.pop %v1313
        %v1358 = vmul.f32 %v1313, %v1357
        %v1359 = vsub.f32 1.0, %v1358
        %v1360 = vmul.f32 %v1357, %v1359
        %v1361 = vadd.f32 %v1357, %v1360
        %vm1362 = vweird.f32 %v1313
        %vm1363 = vweird.f32 %v1357
        %vm1364 = vmor %vm1362, %vm1363
        %v1365 = vsel %vm1364, %v1357, %v1361
        %v1366 = vand.u32 2147483647, %v1313
        %vm1367 = vcmp.eq.f32.partialorder %v1366, 8.507059e+37
        %v1368 = vand.u32 %v1313, 2147483648
        %v1369 = vor.u32 1.1754944e-38, %v1368
        %v1370 = vsel %vm1367, %v1369, %v1365
        %v1371 = vrcp.pop %v1316
        %v1372 = vmul.f32 %v1316, %v1371
        %v1373 = vsub.f32 1.0, %v1372
        %v1374 = vmul.f32 %v1371, %v1373
        %v1375 = vadd.f32 %v1371, %v1374
        %vm1376 = vweird.f32 %v1316
        %vm1377 = vweird.f32 %v1371
        %vm1378 = vmor %vm1376, %vm1377
        %v1379 = vsel %vm1378, %v1371, %v1375
        %v1380 = vand.u32 2147483647, %v1316
        %vm1381 = vcmp.eq.f32.partialorder %v1380, 8.507059e+37
        %v1382 = vand.u32 %v1316, 2147483648
        %v1383 = vor.u32 1.1754944e-38, %v1382
        %v1384 = vsel %vm1381, %v1383, %v1379
        %v1385 = vrcp.pop %v1319
        %v1386 = vmul.f32 %v1319, %v1385
        %v1387 = vsub.f32 1.0, %v1386
        %v1388 = vmul.f32 %v1385, %v1387
        %v1389 = vadd.f32 %v1385, %v1388
        %vm1390 = vweird.f32 %v1319
        %vm1391 = vweird.f32 %v1385
        %vm1392 = vmor %vm1390, %vm1391
        %v1393 = vsel %vm1392, %v1385, %v1389
        %v1394 = vand.u32 2147483647, %v1319
        %vm1395 = vcmp.eq.f32.partialorder %v1394, 8.507059e+37
        %v1396 = vand.u32 %v1319, 2147483648
        %v1397 = vor.u32 1.1754944e-38, %v1396
        %v1398 = vsel %vm1395, %v1397, %v1393
        %v1399 = vrcp.pop %v1322
        %v1400 = vmul.f32 %v1322, %v1399
        %v1401 = vsub.f32 1.0, %v1400
        %v1402 = vmul.f32 %v1399, %v1401
        %v1403 = vadd.f32 %v1399, %v1402
        %vm1404 = vweird.f32 %v1322
        %vm1405 = vweird.f32 %v1399
        %vm1406 = vmor %vm1404, %vm1405
        %v1407 = vsel %vm1406, %v1399, %v1403
        %v1408 = vand.u32 2147483647, %v1322
        %vm1409 = vcmp.eq.f32.partialorder %v1408, 8.507059e+37
        %v1410 = vand.u32 %v1322, 2147483648
        %v1411 = vor.u32 1.1754944e-38, %v1410
        %v1412 = vsel %vm1409, %v1411, %v1407
        %v1413 = vrcp.pop %v1325
        %v1414 = vmul.f32 %v1325, %v1413
        %v1415 = vsub.f32 1.0, %v1414
        %v1416 = vmul.f32 %v1413, %v1415
        %v1417 = vadd.f32 %v1413, %v1416
        %vm1418 = vweird.f32 %v1325
        %vm1419 = vweird.f32 %v1413
        %vm1420 = vmor %vm1418, %vm1419
        %v1421 = vsel %vm1420, %v1413, %v1417
        %v1422 = vand.u32 2147483647, %v1325
        %vm1423 = vcmp.eq.f32.partialorder %v1422, 8.507059e+37
        %v1424 = vand.u32 %v1325, 2147483648
        %v1425 = vor.u32 1.1754944e-38, %v1424
        %v1426 = vsel %vm1423, %v1425, %v1421
        %v1427 = vrcp.pop %v1328
        %v1428 = vmul.f32 %v1328, %v1427
        %v1429 = vsub.f32 1.0, %v1428
        %v1430 = vmul.f32 %v1427, %v1429
        %v1431 = vadd.f32 %v1427, %v1430
        %vm1432 = vweird.f32 %v1328
        %vm1433 = vweird.f32 %v1427
        %vm1434 = vmor %vm1432, %vm1433
        %v1435 = vsel %vm1434, %v1427, %v1431
        %v1436 = vand.u32 2147483647, %v1328
        %vm1437 = vcmp.eq.f32.partialorder %v1436, 8.507059e+37
        %v1438 = vand.u32 %v1328, 2147483648
        %v1439 = vor.u32 1.1754944e-38, %v1438
        %v1440 = vsel %vm1437, %v1439, %v1435
        %v1441 = vmul.f32 %v1290, %v1342
        %v1442 = vmul.f32 %v1292, %v1356
        %v1443 = vmul.f32 %v1294, %v1370
        %v1444 = vmul.f32 %v1296, %v1384
        %v1445 = vmul.f32 %v1298, %v1398
        %v1446 = vmul.f32 %v1300, %v1412
        %v1447 = vmul.f32 %v1302, %v1426
        %v1448 = vmul.f32 %v1304, %v1440
        %v1449 = vpack.c.bf16 %v1442, %v1441
        %v1450 = vpack.c.bf16 %v1444, %v1443
        %v1451 = vpack.c.bf16 %v1446, %v1445
        %v1452 = vpack.c.bf16 %v1448, %v1447
        %v1453 = vld [vmem:[%s10] sm:$0xff]
        %v1454 = vld [vmem:[%s10 + $0x8] sm:$0xff]
        %v1455 = vld [vmem:[%s10 + $0x10] sm:$0xff]
        %v1456 = vld [vmem:[%s10 + $0x18] sm:$0xff]
        %v1457 = vld [vmem:[%s11] sm:$0x3]
        %v1459 = vperm.slane %v1457, 0
        %v1460 = vperm.slane %v1457, 1
        %v1467 = vunpack.c.l.b16 %v1453
        %v1468 = vunpack.c.h.b16 %v1453
        %v1469 = vunpack.c.l.b16 %v1454
        %v1470 = vunpack.c.h.b16 %v1454
        %v1471 = vunpack.c.l.b16 %v1455
        %v1472 = vunpack.c.h.b16 %v1455
        %v1473 = vunpack.c.l.b16 %v1456
        %v1474 = vunpack.c.h.b16 %v1456
        %v1475 = vpack.c.b16 %v1469, %v1467
        %v1476 = vpack.c.b16 %v1470, %v1468
        %v1477 = vpack.c.b16 %v1473, %v1471
        %v1478 = vpack.c.b16 %v1474, %v1472
        %v1484 = vsel %vm1256, %v1449, 0
        %v1487 = vsel %vm1256, %v1450, 0
        %v1490 = vsel %vm1256, %v1451, 0
        %v1493 = vsel %vm1256, %v1452, 0
        %1495 = vmatpush.bf16.msra.mxu0 0
        %1496 = vmatpush.bf16.msra.mxu0 0
        %1497 = vmatpush.bf16.msra.mxu0 0
        %1498 = vmatpush.bf16.msra.mxu0 0
        %1499 = vmatpush.bf16.msra.mxu0 0
        %1500 = vmatpush.bf16.msra.mxu0 0
        %1501 = vmatpush.bf16.msra.mxu0 %v1477
        %1502 = vmatpush.bf16.msra.mxu0 %v1475
        %1503 = vmatmul.bf16.gmra.mxu0 %v1484
        %v1504 = vpop.f32.mrf.mxu0
        %v1505 = vadd.f32 %v1459, %v1504
        %v1506 = vpop.f32.mrf.mxu0
        %v1507 = vadd.f32 %v1459, %v1506
        %1508 = vmatmul.bf16.gmra.mxu0 %v1487
        %v1509 = vpop.f32.mrf.mxu0
        %v1510 = vadd.f32 %v1459, %v1509
        %v1511 = vpop.f32.mrf.mxu0
        %v1512 = vadd.f32 %v1459, %v1511
        %1513 = vmatmul.bf16.gmra.mxu0 %v1490
        %v1514 = vpop.f32.mrf.mxu0
        %v1515 = vadd.f32 %v1459, %v1514
        %v1516 = vpop.f32.mrf.mxu0
        %v1517 = vadd.f32 %v1459, %v1516
        %1518 = vmatmul.bf16.gmra.mxu0 %v1493
        %v1519 = vpop.f32.mrf.mxu0
        %v1520 = vadd.f32 %v1459, %v1519
        %v1521 = vpop.f32.mrf.mxu0
        %v1522 = vadd.f32 %v1459, %v1521
        %1523 = vdwg.mxu0
        %1524 = vmatpush.bf16.msra.mxu0 0
        %1525 = vmatpush.bf16.msra.mxu0 0
        %1526 = vmatpush.bf16.msra.mxu0 0
        %1527 = vmatpush.bf16.msra.mxu0 0
        %1528 = vmatpush.bf16.msra.mxu0 0
        %1529 = vmatpush.bf16.msra.mxu0 0
        %1530 = vmatpush.bf16.msra.mxu0 %v1478
        %1531 = vmatpush.bf16.msra.mxu0 %v1476
        %1532 = vmatmul.bf16.gmra.mxu0 %v1484
        %v1533 = vpop.f32.mrf.mxu0
        %v1534 = vadd.f32 %v1460, %v1533
        %v1535 = vpop.f32.mrf.mxu0
        %v1536 = vadd.f32 %v1460, %v1535
        %1537 = vmatmul.bf16.gmra.mxu0 %v1487
        %v1538 = vpop.f32.mrf.mxu0
        %v1539 = vadd.f32 %v1460, %v1538
        %v1540 = vpop.f32.mrf.mxu0
        %v1541 = vadd.f32 %v1460, %v1540
        %1542 = vmatmul.bf16.gmra.mxu0 %v1490
        %v1543 = vpop.f32.mrf.mxu0
        %v1544 = vadd.f32 %v1460, %v1543
        %v1545 = vpop.f32.mrf.mxu0
        %v1546 = vadd.f32 %v1460, %v1545
        %1547 = vmatmul.bf16.gmra.mxu0 %v1493
        %v1548 = vpop.f32.mrf.mxu0
        %v1549 = vadd.f32 %v1460, %v1548
        %v1550 = vpop.f32.mrf.mxu0
        %v1551 = vadd.f32 %v1460, %v1550
        %1552 = vdwg.mxu0
        %v1553 = vmax.f32 %v1505, %v1534
        %1554 = vmax.xlane.f32.xlu0 %v1553
        %v1555 = vpop.xlane.xlu0 %1554
        %v1556 = vmax.f32 %v1507, %v1536
        %1557 = vmax.xlane.f32.xlu0 %v1556
        %v1558 = vpop.xlane.xlu0 %1557
        %v1559 = vmax.f32 %v1510, %v1539
        %1560 = vmax.xlane.f32.xlu0 %v1559
        %v1561 = vpop.xlane.xlu0 %1560
        %v1562 = vmax.f32 %v1512, %v1541
        %1563 = vmax.xlane.f32.xlu0 %v1562
        %v1564 = vpop.xlane.xlu0 %1563
        %v1565 = vmax.f32 %v1515, %v1544
        %1566 = vmax.xlane.f32.xlu0 %v1565
        %v1567 = vpop.xlane.xlu0 %1566
        %v1568 = vmax.f32 %v1517, %v1546
        %1569 = vmax.xlane.f32.xlu0 %v1568
        %v1570 = vpop.xlane.xlu0 %1569
        %v1571 = vmax.f32 %v1520, %v1549
        %1572 = vmax.xlane.f32.xlu0 %v1571
        %v1573 = vpop.xlane.xlu0 %1572
        %v1574 = vmax.f32 %v1522, %v1551
        %1575 = vmax.xlane.f32.xlu0 %v1574
        %v1576 = vpop.xlane.xlu0 %1575
        %v1577 = vsub.f32 %v1505, %v1555
        %v1578 = vsub.f32 %v1534, %v1555
        %v1579 = vsub.f32 %v1507, %v1558
        %v1580 = vsub.f32 %v1536, %v1558
        %v1581 = vsub.f32 %v1510, %v1561
        %v1582 = vsub.f32 %v1539, %v1561
        %v1583 = vsub.f32 %v1512, %v1564
        %v1584 = vsub.f32 %v1541, %v1564
        %v1585 = vsub.f32 %v1515, %v1567
        %v1586 = vsub.f32 %v1544, %v1567
        %v1587 = vsub.f32 %v1517, %v1570
        %v1588 = vsub.f32 %v1546, %v1570
        %v1589 = vsub.f32 %v1520, %v1573
        %v1590 = vsub.f32 %v1549, %v1573
        %v1591 = vsub.f32 %v1522, %v1576
        %v1592 = vsub.f32 %v1551, %v1576
        %v1593 = vmul.f32 %v1577, 1.442695
        %v1594 = vpow.pop %v1593
        %v1595 = vmul.f32 %v1578, 1.442695
        %v1596 = vpow.pop %v1595
        %v1597 = vmul.f32 %v1579, 1.442695
        %v1598 = vpow.pop %v1597
        %v1599 = vmul.f32 %v1580, 1.442695
        %v1600 = vpow.pop %v1599
        %v1601 = vmul.f32 %v1581, 1.442695
        %v1602 = vpow.pop %v1601
        %v1603 = vmul.f32 %v1582, 1.442695
        %v1604 = vpow.pop %v1603
        %v1605 = vmul.f32 %v1583, 1.442695
        %v1606 = vpow.pop %v1605
        %v1607 = vmul.f32 %v1584, 1.442695
        %v1608 = vpow.pop %v1607
        %v1609 = vmul.f32 %v1585, 1.442695
        %v1610 = vpow.pop %v1609
        %v1611 = vmul.f32 %v1586, 1.442695
        %v1612 = vpow.pop %v1611
        %v1613 = vmul.f32 %v1587, 1.442695
        %v1614 = vpow.pop %v1613
        %v1615 = vmul.f32 %v1588, 1.442695
        %v1616 = vpow.pop %v1615
        %v1617 = vmul.f32 %v1589, 1.442695
        %v1618 = vpow.pop %v1617
        %v1619 = vmul.f32 %v1590, 1.442695
        %v1620 = vpow.pop %v1619
        %v1621 = vmul.f32 %v1591, 1.442695
        %v1622 = vpow.pop %v1621
        %v1623 = vmul.f32 %v1592, 1.442695
        %v1624 = vpow.pop %v1623
        %v1625 = vadd.f32 %v1594, %v1596
        %1626 = vadd.xlane.f32.xlu0 %v1625
        %v1627 = vpop.xlane.xlu0 %1626
        %v1628 = vadd.f32 %v1598, %v1600
        %1629 = vadd.xlane.f32.xlu0 %v1628
        %v1630 = vpop.xlane.xlu0 %1629
        %v1631 = vadd.f32 %v1602, %v1604
        %1632 = vadd.xlane.f32.xlu0 %v1631
        %v1633 = vpop.xlane.xlu0 %1632
        %v1634 = vadd.f32 %v1606, %v1608
        %1635 = vadd.xlane.f32.xlu0 %v1634
        %v1636 = vpop.xlane.xlu0 %1635
        %v1637 = vadd.f32 %v1610, %v1612
        %1638 = vadd.xlane.f32.xlu0 %v1637
        %v1639 = vpop.xlane.xlu0 %1638
        %v1640 = vadd.f32 %v1614, %v1616
        %1641 = vadd.xlane.f32.xlu0 %v1640
        %v1642 = vpop.xlane.xlu0 %1641
        %v1643 = vadd.f32 %v1618, %v1620
        %1644 = vadd.xlane.f32.xlu0 %v1643
        %v1645 = vpop.xlane.xlu0 %1644
        %v1646 = vadd.f32 %v1622, %v1624
        %1647 = vadd.xlane.f32.xlu0 %v1646
        %v1648 = vpop.xlane.xlu0 %1647
        %v1649 = vrcp.pop %v1627
        %v1650 = vmul.f32 %v1627, %v1649
        %v1651 = vsub.f32 1.0, %v1650
        %v1652 = vmul.f32 %v1649, %v1651
        %v1653 = vadd.f32 %v1649, %v1652
        %vm1654 = vweird.f32 %v1627
        %vm1655 = vweird.f32 %v1649
        %vm1656 = vmor %vm1654, %vm1655
        %v1657 = vsel %vm1656, %v1649, %v1653
        %v1658 = vand.u32 2147483647, %v1627
        %vm1659 = vcmp.eq.f32.partialorder %v1658, 8.507059e+37
        %v1660 = vand.u32 %v1627, 2147483648
        %v1661 = vor.u32 1.1754944e-38, %v1660
        %v1662 = vsel %vm1659, %v1661, %v1657
        %v1663 = vrcp.pop %v1630
        %v1664 = vmul.f32 %v1630, %v1663
        %v1665 = vsub.f32 1.0, %v1664
        %v1666 = vmul.f32 %v1663, %v1665
        %v1667 = vadd.f32 %v1663, %v1666
        %vm1668 = vweird.f32 %v1630
        %vm1669 = vweird.f32 %v1663
        %vm1670 = vmor %vm1668, %vm1669
        %v1671 = vsel %vm1670, %v1663, %v1667
        %v1672 = vand.u32 2147483647, %v1630
        %vm1673 = vcmp.eq.f32.partialorder %v1672, 8.507059e+37
        %v1674 = vand.u32 %v1630, 2147483648
        %v1675 = vor.u32 1.1754944e-38, %v1674
        %v1676 = vsel %vm1673, %v1675, %v1671
        %v1677 = vrcp.pop %v1633
        %v1678 = vmul.f32 %v1633, %v1677
        %v1679 = vsub.f32 1.0, %v1678
        %v1680 = vmul.f32 %v1677, %v1679
        %v1681 = vadd.f32 %v1677, %v1680
        %vm1682 = vweird.f32 %v1633
        %vm1683 = vweird.f32 %v1677
        %vm1684 = vmor %vm1682, %vm1683
        %v1685 = vsel %vm1684, %v1677, %v1681
        %v1686 = vand.u32 2147483647, %v1633
        %vm1687 = vcmp.eq.f32.partialorder %v1686, 8.507059e+37
        %v1688 = vand.u32 %v1633, 2147483648
        %v1689 = vor.u32 1.1754944e-38, %v1688
        %v1690 = vsel %vm1687, %v1689, %v1685
        %v1691 = vrcp.pop %v1636
        %v1692 = vmul.f32 %v1636, %v1691
        %v1693 = vsub.f32 1.0, %v1692
        %v1694 = vmul.f32 %v1691, %v1693
        %v1695 = vadd.f32 %v1691, %v1694
        %vm1696 = vweird.f32 %v1636
        %vm1697 = vweird.f32 %v1691
        %vm1698 = vmor %vm1696, %vm1697
        %v1699 = vsel %vm1698, %v1691, %v1695
        %v1700 = vand.u32 2147483647, %v1636
        %vm1701 = vcmp.eq.f32.partialorder %v1700, 8.507059e+37
        %v1702 = vand.u32 %v1636, 2147483648
        %v1703 = vor.u32 1.1754944e-38, %v1702
        %v1704 = vsel %vm1701, %v1703, %v1699
        %v1705 = vrcp.pop %v1639
        %v1706 = vmul.f32 %v1639, %v1705
        %v1707 = vsub.f32 1.0, %v1706
        %v1708 = vmul.f32 %v1705, %v1707
        %v1709 = vadd.f32 %v1705, %v1708
        %vm1710 = vweird.f32 %v1639
        %vm1711 = vweird.f32 %v1705
        %vm1712 = vmor %vm1710, %vm1711
        %v1713 = vsel %vm1712, %v1705, %v1709
        %v1714 = vand.u32 2147483647, %v1639
        %vm1715 = vcmp.eq.f32.partialorder %v1714, 8.507059e+37
        %v1716 = vand.u32 %v1639, 2147483648
        %v1717 = vor.u32 1.1754944e-38, %v1716
        %v1718 = vsel %vm1715, %v1717, %v1713
        %v1719 = vrcp.pop %v1642
        %v1720 = vmul.f32 %v1642, %v1719
        %v1721 = vsub.f32 1.0, %v1720
        %v1722 = vmul.f32 %v1719, %v1721
        %v1723 = vadd.f32 %v1719, %v1722
        %vm1724 = vweird.f32 %v1642
        %vm1725 = vweird.f32 %v1719
        %vm1726 = vmor %vm1724, %vm1725
        %v1727 = vsel %vm1726, %v1719, %v1723
        %v1728 = vand.u32 2147483647, %v1642
        %vm1729 = vcmp.eq.f32.partialorder %v1728, 8.507059e+37
        %v1730 = vand.u32 %v1642, 2147483648
        %v1731 = vor.u32 1.1754944e-38, %v1730
        %v1732 = vsel %vm1729, %v1731, %v1727
        %v1733 = vrcp.pop %v1645
        %v1734 = vmul.f32 %v1645, %v1733
        %v1735 = vsub.f32 1.0, %v1734
        %v1736 = vmul.f32 %v1733, %v1735
        %v1737 = vadd.f32 %v1733, %v1736
        %vm1738 = vweird.f32 %v1645
        %vm1739 = vweird.f32 %v1733
        %vm1740 = vmor %vm1738, %vm1739
        %v1741 = vsel %vm1740, %v1733, %v1737
        %v1742 = vand.u32 2147483647, %v1645
        %vm1743 = vcmp.eq.f32.partialorder %v1742, 8.507059e+37
        %v1744 = vand.u32 %v1645, 2147483648
        %v1745 = vor.u32 1.1754944e-38, %v1744
        %v1746 = vsel %vm1743, %v1745, %v1741
        %v1747 = vrcp.pop %v1648
        %v1748 = vmul.f32 %v1648, %v1747
        %v1749 = vsub.f32 1.0, %v1748
        %v1750 = vmul.f32 %v1747, %v1749
        %v1751 = vadd.f32 %v1747, %v1750
        %vm1752 = vweird.f32 %v1648
        %vm1753 = vweird.f32 %v1747
        %vm1754 = vmor %vm1752, %vm1753
        %v1755 = vsel %vm1754, %v1747, %v1751
        %v1756 = vand.u32 2147483647, %v1648
        %vm1757 = vcmp.eq.f32.partialorder %v1756, 8.507059e+37
        %v1758 = vand.u32 %v1648, 2147483648
        %v1759 = vor.u32 1.1754944e-38, %v1758
        %v1760 = vsel %vm1757, %v1759, %v1755
        %v1761 = vmul.f32 %v1594, %v1662
        %v1762 = vmul.f32 %v1596, %v1662
        %v1763 = vmul.f32 %v1598, %v1676
        %v1764 = vmul.f32 %v1600, %v1676
        %v1765 = vmul.f32 %v1602, %v1690
        %v1766 = vmul.f32 %v1604, %v1690
        %v1767 = vmul.f32 %v1606, %v1704
        %v1768 = vmul.f32 %v1608, %v1704
        %v1769 = vmul.f32 %v1610, %v1718
        %v1770 = vmul.f32 %v1612, %v1718
        %v1771 = vmul.f32 %v1614, %v1732
        %v1772 = vmul.f32 %v1616, %v1732
        %v1773 = vmul.f32 %v1618, %v1746
        %v1774 = vmul.f32 %v1620, %v1746
        %v1775 = vmul.f32 %v1622, %v1760
        %v1776 = vmul.f32 %v1624, %v1760
        %v1777 = vpack.c.bf16 %v1762, %v1761
        %v1778 = vpack.c.bf16 %v1764, %v1763
        %v1779 = vpack.c.bf16 %v1766, %v1765
        %v1780 = vpack.c.bf16 %v1768, %v1767
        %v1781 = vpack.c.bf16 %v1770, %v1769
        %v1782 = vpack.c.bf16 %v1772, %v1771
        %v1783 = vpack.c.bf16 %v1774, %v1773
        %v1784 = vpack.c.bf16 %v1776, %v1775
        %1785 = vst [vmem:[%s453] sm:$0xff] %v1777
        %1786 = vst [vmem:[%s453 + $0x8] sm:$0xff] %v1778
        %1787 = vst [vmem:[%s453 + $0x10] sm:$0xff] %v1779
        %1788 = vst [vmem:[%s453 + $0x18] sm:$0xff] %v1780
        %1789 = vst [vmem:[%s453 + $0x20] sm:$0xff] %v1781
        %1790 = vst [vmem:[%s453 + $0x28] sm:$0xff] %v1782
        %1791 = vst [vmem:[%s453 + $0x30] sm:$0xff] %v1783
        %1792 = vst [vmem:[%s453 + $0x38] sm:$0xff] %v1784
        %v1793 = vsel %vm1256, %v1441, 0.0
        %v1794 = vsel %vm1256, %v1442, 0.0
        %v1795 = vsel %vm1256, %v1443, 0.0
        %v1796 = vsel %vm1256, %v1444, 0.0
        %v1797 = vsel %vm1256, %v1445, 0.0
        %v1798 = vsel %vm1256, %v1446, 0.0
        %v1799 = vsel %vm1256, %v1447, 0.0
        %v1800 = vsel %vm1256, %v1448, 0.0
        %1801 = vst [vmem:[%s479] sm:$0xff] %v1793
        %1802 = vst [vmem:[%s479 + $0x8] sm:$0xff] %v1794
        %1803 = vst [vmem:[%s479 + $0x10] sm:$0xff] %v1795
        %1804 = vst [vmem:[%s479 + $0x18] sm:$0xff] %v1796
        %1805 = vst [vmem:[%s479 + $0x20] sm:$0xff] %v1797
        %1806 = vst [vmem:[%s479 + $0x28] sm:$0xff] %v1798
        %1807 = vst [vmem:[%s479 + $0x30] sm:$0xff] %v1799
        %1808 = vst [vmem:[%s479 + $0x38] sm:$0xff] %v1800
        %s1809 = sand.u32 %s298, 1
        %s1810 = scalar_lea.sflag [#allocation3], %s1809
        %s1811 = sand.u32 %s298, 1
        %s1812 = smul.addr %s1811, 64
        %s1813 = scalar_lea.vmem [#allocation2], %s1812
        %s1814 = smul.u32 8, %s28
        %p1815 = scmp.lt.s32.totalorder %s1814, 31
        %s1816 = scalar_select %p1815, %s1814, 31
        %s1817 = smul.addr %s1816, 8
        %s1818 = scalar_lea.vmem %s13, %s1817
        // Predicated region
        $region69: #{prodlda_forward.1} parent=67 // pred_check
          %p1819 = pneg %p308
        $region70: #{prodlda_forward.1} parent=67 // pred_check_branch
          %1821 = sbr.rel (%p1819) target = $region72
        $region71: #{prodlda_forward.1} parent=67 // pred_region
          %s1822 = smul.u32 8, %s28
          %1824 = vsyncadd %s1810, 0
          %s1825 = smul.addr %s1822, 2
          %s1826 = smul.addr %s1825, 4
          %s1827 = scalar_lea.hbm %s12, %s1826
          %s1828 = sshll.u32 %s1813, 4
          %s1829 = int_to_ptr.vmem [resolvable:$true] %s1828
          %s1830 = sshll.u32 %s1827, 4
          %s1831 = int_to_ptr.hbm [resolvable:$true] %s1830
          %1836 = dma.vmem_to_hbm [thread:$0]  %s1829, 1024, %s1831, %s1810, 128, 128, 8
        $region72: #{prodlda_forward.1} parent=67 // pred_fallthru
          _
        // Predicated region
        $region73: #{prodlda_forward.1} parent=67 // pred_check
          %p1837 = pneg %p334
        $region74: #{prodlda_forward.1} parent=67 // pred_check_branch
          %1839 = sbr.rel (%p1837) target = $region76
        $region75: #{prodlda_forward.1} parent=67 // pred_region
          %s1840 = smul.u32 8, %s28
        $region76: #{prodlda_forward.1} parent=67 // pred_fallthru
          _
      $region68: #{prodlda_forward.1} parent=5 // pred_fallthru
        _
      %p1841 = scmp.le.s32.totalorder 2, %s23
      // Predicated region
      $region77: #{prodlda_forward.1} parent=5 // pred_check
        %p1842 = pneg %p1841
      $region78: #{prodlda_forward.1} parent=5 // pred_check_branch
        %1844 = sbr.rel (%p1842) target = $region80
      $region79: #{prodlda_forward.1} parent=5 // pred_region
        %s1845 = ssub.s32 %s23, 2
        // Predicated region
        $region81: #{prodlda_forward.1} parent=79 // pred_check
          %p1846 = pneg %p314
        $region82: #{prodlda_forward.1} parent=79 // pred_check_branch
          %1848 = sbr.rel (%p1846) target = $region84
        $region83: #{prodlda_forward.1} parent=79 // pred_region
          %s1849 = sand.u32 %s299, 1
          %s1850 = scalar_lea.sflag [#allocation3], %s1849
          %s1851 = sand.u32 %s299, 1
          %s1852 = smul.addr %s1851, 64
          %s1853 = scalar_lea.vmem [#allocation2], %s1852
          %1855 = dma.done %s1850, 1024
        $region84: #{prodlda_forward.1} parent=79 // pred_fallthru
          _
        // Predicated region
        $region85: #{prodlda_forward.1} parent=79 // pred_check
          %p1856 = pneg %p340
        $region86: #{prodlda_forward.1} parent=79 // pred_check_branch
          %1858 = sbr.rel (%p1856) target = $region88
        $region87: #{prodlda_forward.1} parent=79 // pred_region
          %s1859 = smul.u32 8, %s29
          %p1860 = scmp.lt.s32.totalorder %s1859, 31
          %s1861 = scalar_select %p1860, %s1859, 31
          %s1862 = smul.addr %s1861, 8
          %s1863 = scalar_lea.vmem %s13, %s1862
        $region88: #{prodlda_forward.1} parent=79 // pred_fallthru
          _
      $region80: #{prodlda_forward.1} parent=5 // pred_fallthru
        _
    $region6: #{prodlda_forward.1} parent=1 // loop_footer
      %s27 = sadd.s32 1, %s23
    $region7: #{prodlda_forward.1} parent=1 // loop_footer_branch
      %22 = sbr.rel target = $region3
    $region8: #{prodlda_forward.1} parent=1 // loop_exit
      _
    %1864 = vsyncpa [#allocation3], 1
    %s1865 = scalar_lea.sflag [#allocation3], 1
    %1866 = vsyncpa %s1865, 1

</llo_original>
